<compile_context>
chip_gen: v7x
topology: tpu7x:2x2x1
jax: 0.10.0
libtpu: 0.0.40
codegen_flags: <defaults>
</compile_context>

<pallas_src>
import jax
import jax.numpy as jnp
from jax.experimental import pallas as pl
from jax.experimental.pallas import tpu as pltpu


def _layernorm(x, gamma, beta, eps=1e-5):
    # LayerNorm over the last axis (ch_dim), matching torch.nn.LayerNorm(ch_dim)
    mu = jnp.mean(x, axis=-1, keepdims=True)
    var = jnp.mean((x - mu) ** 2, axis=-1, keepdims=True)
    return (x - mu) * jax.lax.rsqrt(var + eps) * gamma + beta


def _gelu_exact(x):
    # torch.nn.GELU() default is the exact erf formulation (kept exact; tanh
    # approx would move work to the EUP but diverges slightly from the spec).
    return 0.5 * x * (1.0 + jax.lax.erf(x * 0.7071067811865476))


def mixer_kernel(x_ref,
                 g1_ref, be1_ref, w1t_ref, b1_ref, w2t_ref, b2_ref,
                 g2_ref, be2_ref, w3_ref, b3_ref, w4_ref, b4_ref,
                 o_ref):
    bt, n, d = x_ref.shape
    # Merge the batch block into the row axis; layout no-op when n % 8 == 0.
    x = x_ref[...].reshape(bt * n, d).astype(jnp.float32)          # (bt*n, D) fp32

    # ---------------- token mixing ----------------
    ln1 = _layernorm(x, g1_ref[...], be1_ref[...])                 # fp32
    w1t = w1t_ref[...]                                             # (H_tok, N)  bf16
    w2t = w2t_ref[...]                                             # (N, H_tok)  bf16
    b1 = b1_ref[...]                                               # (H_tok, 1)  fp32
    b2 = b2_ref[...]                                               # (N, 1)      fp32

    x1_rows = []
    for b in range(bt):                                            # static, small
        ln1_b = ln1[b * n:(b + 1) * n, :].astype(jnp.bfloat16)     # (N, D)
        # (H_tok, D) = W1 @ LN1(x_b): token-dim contraction, transpose-free.
        h = jnp.dot(w1t, ln1_b, preferred_element_type=jnp.float32) + b1
        h = _gelu_exact(h).astype(jnp.bfloat16)
        # (N, D) = W2 @ h: result already in 'b n d' orientation.
        y = jnp.dot(w2t, h, preferred_element_type=jnp.float32) + b2
        x1_rows.append(x[b * n:(b + 1) * n, :] + y)                # residual (fp32)
    x1 = jnp.concatenate(x1_rows, axis=0) if bt > 1 else x1_rows[0]   # (bt*n, D)

    # ---------------- channel mixing ----------------
    ln2 = _layernorm(x1, g2_ref[...], be2_ref[...]).astype(jnp.bfloat16)
    h2 = jnp.dot(ln2, w3_ref[...], preferred_element_type=jnp.float32) + b3_ref[...]
    h2 = _gelu_exact(h2).astype(jnp.bfloat16)
    z = jnp.dot(h2, w4_ref[...], preferred_element_type=jnp.float32) + b4_ref[...]

    o_ref[...] = (x1 + z).reshape(bt, n, d).astype(o_ref.dtype)    # residual, (bt,N,D)


def mixer_layer(x, params, *, batch_block=None):
    B, N, D = x.shape
    if batch_block is None:
        divisors = [c for c in (8, 4, 2, 1) if B % c == 0]
        # Prefer >=2 grid steps so both TensorCores are fed on v7x.
        batch_block = next((c for c in divisors if B // c >= 2), divisors[-1])
    bt = batch_block

    param_order = ["g1", "be1", "w1t", "b1", "w2t", "b2",
                   "g2", "be2", "w3", "b3", "w4", "b4"]
    param_arrays = [params[k] for k in param_order]

    in_specs = [pl.BlockSpec((bt, N, D), lambda b: (b, 0, 0))]
    # Weights/biases: whole-array blocks with a constant index_map (the same
    # block is revisited every grid step, so they are not re-fetched per step).
    in_specs += [pl.BlockSpec(p.shape, lambda b: (0, 0)) for p in param_arrays]

    return pl.pallas_call(
        mixer_kernel,
        out_shape=jax.ShapeDtypeStruct((B, N, D), x.dtype),
        grid_spec=pltpu.PrefetchScalarGridSpec(
            num_scalar_prefetch=0,
            grid=(B // bt,),
            in_specs=in_specs,
            out_specs=pl.BlockSpec((bt, N, D), lambda b: (b, 0, 0)),
        ),
        compiler_params=pltpu.CompilerParams(
            dimension_semantics=("parallel",),
            vmem_limit_bytes=48 * 1024 * 1024,
        ),
    )(x, *param_arrays)


def init_params(key, token_dim, ch_dim, token_hdim=256, ch_hdim=256):
    ks = jax.random.split(key, 8)
    scale = 0.02
    f32, bf16 = jnp.float32, jnp.bfloat16
    return {
        # token_mix LayerNorm(ch_dim)
        "g1":  jnp.ones((1, ch_dim), f32),
        "be1": jnp.zeros((1, ch_dim), f32),
        # token MLP: Linear(token_dim -> token_hdim) -> GELU -> Linear(token_hdim -> token_dim)
        # weights kept in nn.Linear's native (out, in) layout -> transpose-free kernel,
        # stored in bf16 (MXU inputs); biases / LN params stay fp32.
        "w1t": (scale * jax.random.normal(ks[0], (token_hdim, token_dim), f32)).astype(bf16),
        "b1":  scale * jax.random.normal(ks[1], (token_hdim, 1), f32),
        "w2t": (scale * jax.random.normal(ks[2], (token_dim, token_hdim), f32)).astype(bf16),
        "b2":  scale * jax.random.normal(ks[3], (token_dim, 1), f32),
        # channel_mix LayerNorm(ch_dim)
        "g2":  jnp.ones((1, ch_dim), f32),
        "be2": jnp.zeros((1, ch_dim), f32),
        # channel MLP weights stored (in, out) so `act @ W` is the natural orientation.
        "w3":  (scale * jax.random.normal(ks[4], (ch_dim, ch_hdim), f32)).astype(bf16),
        "b3":  scale * jax.random.normal(ks[5], (1, ch_hdim), f32),
        "w4":  (scale * jax.random.normal(ks[6], (ch_hdim, ch_dim), f32)).astype(bf16),
        "b4":  scale * jax.random.normal(ks[7], (1, ch_dim), f32),
    }


def mixer_reference(x, p):
    # Pure-JAX reference mirroring the kernel's bf16-matmul / fp32-elementwise split.
    f32 = jnp.float32

    def ln(v, g, b):
        mu = jnp.mean(v, axis=-1, keepdims=True)
        var = jnp.mean((v - mu) ** 2, axis=-1, keepdims=True)
        return (v - mu) * jax.lax.rsqrt(var + 1e-5) * g + b

    def gelu(v):
        return 0.5 * v * (1.0 + jax.lax.erf(v * 0.7071067811865476))

    xf = x.astype(f32)
    # token mixing ('b n d -> b d n' handled by einsum index order)
    t = ln(xf, p["g1"], p["be1"]).astype(jnp.bfloat16)
    h = jnp.einsum("hn,bnd->bhd", p["w1t"], t, preferred_element_type=f32) + p["b1"]
    h = gelu(h).astype(jnp.bfloat16)
    y = jnp.einsum("nh,bhd->bnd", p["w2t"], h, preferred_element_type=f32) + p["b2"]
    x1 = xf + y
    # channel mixing
    c = ln(x1, p["g2"], p["be2"]).astype(jnp.bfloat16)
    h2 = jnp.einsum("bnd,dh->bnh", c, p["w3"], preferred_element_type=f32) + p["b3"]
    h2 = gelu(h2).astype(jnp.bfloat16)
    z = jnp.einsum("bnh,hd->bnd", h2, p["w4"], preferred_element_type=f32) + p["b4"]
    return x1 + z


if __name__ == "__main__":
    B = 4
    token_dim = 8        # N (tokens)   -- sublane-aligned
    ch_dim = 128         # D (channels) -- lane-aligned
    token_hdim = 256     # module defaults
    ch_hdim = 256

    key = jax.random.PRNGKey(0)
    kx, kp = jax.random.split(key)
    x = jax.random.normal(kx, (B, token_dim, ch_dim), jnp.float32)
    params = init_params(kp, token_dim, ch_dim, token_hdim, ch_hdim)

    out = mixer_layer(x, params)
    out = jax.block_until_ready(out)

    ref = mixer_reference(x, params)
    assert out.shape == (B, token_dim, ch_dim)
    assert jnp.allclose(out, ref, atol=2e-3, rtol=2e-3), float(jnp.max(jnp.abs(out - ref)))

    print("KERNEL_OK")
</pallas_src>

<mosaic_0001>
module attributes {stable_mosaic.version = 11 : i64} {
  func.func @mixer_kernel(%arg0: i32, %arg1: memref<2x8x128xf32, #tpu.memory_space<vmem>>, %arg2: memref<1x128xf32, #tpu.memory_space<vmem>>, %arg3: memref<1x128xf32, #tpu.memory_space<vmem>>, %arg4: memref<256x8xbf16, #tpu.memory_space<vmem>>, %arg5: memref<256x1xf32, #tpu.memory_space<vmem>>, %arg6: memref<8x256xbf16, #tpu.memory_space<vmem>>, %arg7: memref<8x1xf32, #tpu.memory_space<vmem>>, %arg8: memref<1x128xf32, #tpu.memory_space<vmem>>, %arg9: memref<1x128xf32, #tpu.memory_space<vmem>>, %arg10: memref<128x256xbf16, #tpu.memory_space<vmem>>, %arg11: memref<1x256xf32, #tpu.memory_space<vmem>>, %arg12: memref<256x128xbf16, #tpu.memory_space<vmem>>, %arg13: memref<1x128xf32, #tpu.memory_space<vmem>>, %arg14: memref<2x8x128xf32, #tpu.memory_space<vmem>>) attributes {dimension_semantics = [#tpu.dimension_semantics<parallel>], iteration_bounds = array<i64: 2>, scalar_prefetch = 0 : i64, scratch_operands = 0 : i64, tpu.core_type = #tpu.core_type<tc>, window_params = [{transform_indices = @transform_0, window_bounds = array<i64: 2, 8, 128>}, {pipeline_mode = #tpu.pipeline_mode<synchronous>, transform_indices = @transform_1, window_bounds = array<i64: 1, 128>}, {pipeline_mode = #tpu.pipeline_mode<synchronous>, transform_indices = @transform_2, window_bounds = array<i64: 1, 128>}, {pipeline_mode = #tpu.pipeline_mode<synchronous>, transform_indices = @transform_3, window_bounds = array<i64: 256, 8>}, {pipeline_mode = #tpu.pipeline_mode<synchronous>, transform_indices = @transform_4, window_bounds = array<i64: 256, 1>}, {pipeline_mode = #tpu.pipeline_mode<synchronous>, transform_indices = @transform_5, window_bounds = array<i64: 8, 256>}, {pipeline_mode = #tpu.pipeline_mode<synchronous>, transform_indices = @transform_6, window_bounds = array<i64: 8, 1>}, {pipeline_mode = #tpu.pipeline_mode<synchronous>, transform_indices = @transform_7, window_bounds = array<i64: 1, 128>}, {pipeline_mode = #tpu.pipeline_mode<synchronous>, transform_indices = @transform_8, window_bounds = array<i64: 1, 128>}, {pipeline_mode = #tpu.pipeline_mode<synchronous>, transform_indices = @transform_9, window_bounds = array<i64: 128, 256>}, {pipeline_mode = #tpu.pipeline_mode<synchronous>, transform_indices = @transform_10, window_bounds = array<i64: 1, 256>}, {pipeline_mode = #tpu.pipeline_mode<synchronous>, transform_indices = @transform_11, window_bounds = array<i64: 256, 128>}, {pipeline_mode = #tpu.pipeline_mode<synchronous>, transform_indices = @transform_12, window_bounds = array<i64: 1, 128>}, {transform_indices = @transform_13, window_bounds = array<i64: 2, 8, 128>}]} {
    %c0 = arith.constant 0 : index
    %c0_0 = arith.constant 0 : index
    %c0_1 = arith.constant 0 : index
    %0 = vector.load %arg1[%c0, %c0_0, %c0_1] : memref<2x8x128xf32, #tpu.memory_space<vmem>>, vector<2x8x128xf32>
    %1 = vector.shape_cast %0 : vector<2x8x128xf32> to vector<16x128xf32>
    %c0_2 = arith.constant 0 : index
    %c0_3 = arith.constant 0 : index
    %2 = vector.load %arg2[%c0_2, %c0_3] : memref<1x128xf32, #tpu.memory_space<vmem>>, vector<1x128xf32>
    %c0_4 = arith.constant 0 : index
    %c0_5 = arith.constant 0 : index
    %3 = vector.load %arg3[%c0_4, %c0_5] : memref<1x128xf32, #tpu.memory_space<vmem>>, vector<1x128xf32>
    %cst = arith.constant dense<0.000000e+00> : vector<16xf32>
    %4 = vector.multi_reduction <add>, %1, %cst [1] : vector<16x128xf32> to vector<16xf32>
    %5 = vector.shape_cast %4 : vector<16xf32> to vector<16x1xf32>
    %cst_6 = arith.constant 1.280000e+02 : f32
    %6 = vector.broadcast %cst_6 : f32 to vector<16x1xf32>
    %7 = arith.divf %5, %6 : vector<16x1xf32>
    %8 = vector.broadcast %7 : vector<16x1xf32> to vector<16x128xf32>
    %9 = arith.subf %1, %8 : vector<16x128xf32>
    %10 = arith.mulf %9, %9 : vector<16x128xf32>
    %cst_7 = arith.constant dense<0.000000e+00> : vector<16xf32>
    %11 = vector.multi_reduction <add>, %10, %cst_7 [1] : vector<16x128xf32> to vector<16xf32>
    %12 = vector.shape_cast %11 : vector<16xf32> to vector<16x1xf32>
    %cst_8 = arith.constant 1.280000e+02 : f32
    %13 = vector.broadcast %cst_8 : f32 to vector<16x1xf32>
    %14 = arith.divf %12, %13 : vector<16x1xf32>
    %15 = vector.broadcast %7 : vector<16x1xf32> to vector<16x128xf32>
    %16 = arith.subf %1, %15 : vector<16x128xf32>
    %cst_9 = arith.constant 9.99999974E-6 : f32
    %17 = vector.broadcast %cst_9 : f32 to vector<16x1xf32>
    %18 = arith.addf %14, %17 : vector<16x1xf32>
    %19 = math.rsqrt %18 : vector<16x1xf32>
    %20 = vector.broadcast %19 : vector<16x1xf32> to vector<16x128xf32>
    %21 = arith.mulf %16, %20 : vector<16x128xf32>
    %22 = vector.broadcast %2 : vector<1x128xf32> to vector<16x128xf32>
    %23 = arith.mulf %21, %22 : vector<16x128xf32>
    %24 = vector.broadcast %3 : vector<1x128xf32> to vector<16x128xf32>
    %25 = arith.addf %23, %24 : vector<16x128xf32>
    %c0_10 = arith.constant 0 : index
    %c0_11 = arith.constant 0 : index
    %26 = vector.load %arg4[%c0_10, %c0_11] : memref<256x8xbf16, #tpu.memory_space<vmem>>, vector<256x8xbf16>
    %c0_12 = arith.constant 0 : index
    %c0_13 = arith.constant 0 : index
    %27 = vector.load %arg6[%c0_12, %c0_13] : memref<8x256xbf16, #tpu.memory_space<vmem>>, vector<8x256xbf16>
    %c0_14 = arith.constant 0 : index
    %c0_15 = arith.constant 0 : index
    %28 = vector.load %arg5[%c0_14, %c0_15] : memref<256x1xf32, #tpu.memory_space<vmem>>, vector<256x1xf32>
    %c0_16 = arith.constant 0 : index
    %c0_17 = arith.constant 0 : index
    %29 = vector.load %arg7[%c0_16, %c0_17] : memref<8x1xf32, #tpu.memory_space<vmem>>, vector<8x1xf32>
    %30 = vector.extract_strided_slice %25 {offsets = [0, 0], sizes = [8, 128], strides = [1, 1]} : vector<16x128xf32> to vector<8x128xf32>
    %31 = arith.truncf %30 : vector<8x128xf32> to vector<8x128xbf16>
    %cst_18 = arith.constant dense<0.000000e+00> : vector<256x128xf32>
    %32 = tpu.matmul %26, %31, %cst_18 {dimension_numbers = #tpu.dot_dimension_numbers<[1], [0], [0], [1], [0, 0, 1, 1], [], []>} : vector<256x8xbf16>, vector<8x128xbf16>, vector<256x128xf32> -> vector<256x128xf32>
    %33 = vector.broadcast %28 : vector<256x1xf32> to vector<256x128xf32>
    %34 = arith.addf %32, %33 : vector<256x128xf32>
    %cst_19 = arith.constant 5.000000e-01 : f32
    %35 = vector.broadcast %cst_19 : f32 to vector<256x128xf32>
    %36 = arith.mulf %35, %34 : vector<256x128xf32>
    %cst_20 = arith.constant 0.707106769 : f32
    %37 = vector.broadcast %cst_20 : f32 to vector<256x128xf32>
    %38 = arith.mulf %34, %37 : vector<256x128xf32>
    %39 = math.erf %38 : vector<256x128xf32>
    %cst_21 = arith.constant 1.000000e+00 : f32
    %40 = vector.broadcast %cst_21 : f32 to vector<256x128xf32>
    %41 = arith.addf %40, %39 : vector<256x128xf32>
    %42 = arith.mulf %36, %41 : vector<256x128xf32>
    %43 = arith.truncf %42 : vector<256x128xf32> to vector<256x128xbf16>
    %cst_22 = arith.constant dense<0.000000e+00> : vector<8x128xf32>
    %44 = tpu.matmul %27, %43, %cst_22 {dimension_numbers = #tpu.dot_dimension_numbers<[1], [0], [0], [1], [0, 0, 1, 1], [], []>} : vector<8x256xbf16>, vector<256x128xbf16>, vector<8x128xf32> -> vector<8x128xf32>
    %45 = vector.broadcast %29 : vector<8x1xf32> to vector<8x128xf32>
    %46 = arith.addf %44, %45 : vector<8x128xf32>
    %47 = vector.extract_strided_slice %1 {offsets = [0, 0], sizes = [8, 128], strides = [1, 1]} : vector<16x128xf32> to vector<8x128xf32>
    %48 = arith.addf %47, %46 : vector<8x128xf32>
    %49 = vector.extract_strided_slice %25 {offsets = [8, 0], sizes = [8, 128], strides = [1, 1]} : vector<16x128xf32> to vector<8x128xf32>
    %50 = arith.truncf %49 : vector<8x128xf32> to vector<8x128xbf16>
    %cst_23 = arith.constant dense<0.000000e+00> : vector<256x128xf32>
    %51 = tpu.matmul %26, %50, %cst_23 {dimension_numbers = #tpu.dot_dimension_numbers<[1], [0], [0], [1], [0, 0, 1, 1], [], []>} : vector<256x8xbf16>, vector<8x128xbf16>, vector<256x128xf32> -> vector<256x128xf32>
    %52 = vector.broadcast %28 : vector<256x1xf32> to vector<256x128xf32>
    %53 = arith.addf %51, %52 : vector<256x128xf32>
    %cst_24 = arith.constant 5.000000e-01 : f32
    %54 = vector.broadcast %cst_24 : f32 to vector<256x128xf32>
    %55 = arith.mulf %54, %53 : vector<256x128xf32>
    %cst_25 = arith.constant 0.707106769 : f32
    %56 = vector.broadcast %cst_25 : f32 to vector<256x128xf32>
    %57 = arith.mulf %53, %56 : vector<256x128xf32>
    %58 = math.erf %57 : vector<256x128xf32>
    %cst_26 = arith.constant 1.000000e+00 : f32
    %59 = vector.broadcast %cst_26 : f32 to vector<256x128xf32>
    %60 = arith.addf %59, %58 : vector<256x128xf32>
    %61 = arith.mulf %55, %60 : vector<256x128xf32>
    %62 = arith.truncf %61 : vector<256x128xf32> to vector<256x128xbf16>
    %cst_27 = arith.constant dense<0.000000e+00> : vector<8x128xf32>
    %63 = tpu.matmul %27, %62, %cst_27 {dimension_numbers = #tpu.dot_dimension_numbers<[1], [0], [0], [1], [0, 0, 1, 1], [], []>} : vector<8x256xbf16>, vector<256x128xbf16>, vector<8x128xf32> -> vector<8x128xf32>
    %64 = vector.broadcast %29 : vector<8x1xf32> to vector<8x128xf32>
    %65 = arith.addf %63, %64 : vector<8x128xf32>
    %66 = vector.extract_strided_slice %1 {offsets = [8, 0], sizes = [8, 128], strides = [1, 1]} : vector<16x128xf32> to vector<8x128xf32>
    %67 = arith.addf %66, %65 : vector<8x128xf32>
    %68 = tpu.concatenate %48, %67 in 0 : vector<8x128xf32>, vector<8x128xf32> -> vector<16x128xf32>
    %c0_28 = arith.constant 0 : index
    %c0_29 = arith.constant 0 : index
    %69 = vector.load %arg8[%c0_28, %c0_29] : memref<1x128xf32, #tpu.memory_space<vmem>>, vector<1x128xf32>
    %c0_30 = arith.constant 0 : index
    %c0_31 = arith.constant 0 : index
    %70 = vector.load %arg9[%c0_30, %c0_31] : memref<1x128xf32, #tpu.memory_space<vmem>>, vector<1x128xf32>
    %cst_32 = arith.constant dense<0.000000e+00> : vector<16xf32>
    %71 = vector.multi_reduction <add>, %68, %cst_32 [1] : vector<16x128xf32> to vector<16xf32>
    %72 = vector.shape_cast %71 : vector<16xf32> to vector<16x1xf32>
    %cst_33 = arith.constant 1.280000e+02 : f32
    %73 = vector.broadcast %cst_33 : f32 to vector<16x1xf32>
    %74 = arith.divf %72, %73 : vector<16x1xf32>
    %75 = vector.broadcast %74 : vector<16x1xf32> to vector<16x128xf32>
    %76 = arith.subf %68, %75 : vector<16x128xf32>
    %77 = arith.mulf %76, %76 : vector<16x128xf32>
    %cst_34 = arith.constant dense<0.000000e+00> : vector<16xf32>
    %78 = vector.multi_reduction <add>, %77, %cst_34 [1] : vector<16x128xf32> to vector<16xf32>
    %79 = vector.shape_cast %78 : vector<16xf32> to vector<16x1xf32>
    %cst_35 = arith.constant 1.280000e+02 : f32
    %80 = vector.broadcast %cst_35 : f32 to vector<16x1xf32>
    %81 = arith.divf %79, %80 : vector<16x1xf32>
    %82 = vector.broadcast %74 : vector<16x1xf32> to vector<16x128xf32>
    %83 = arith.subf %68, %82 : vector<16x128xf32>
    %cst_36 = arith.constant 9.99999974E-6 : f32
    %84 = vector.broadcast %cst_36 : f32 to vector<16x1xf32>
    %85 = arith.addf %81, %84 : vector<16x1xf32>
    %86 = math.rsqrt %85 : vector<16x1xf32>
    %87 = vector.broadcast %86 : vector<16x1xf32> to vector<16x128xf32>
    %88 = arith.mulf %83, %87 : vector<16x128xf32>
    %89 = vector.broadcast %69 : vector<1x128xf32> to vector<16x128xf32>
    %90 = arith.mulf %88, %89 : vector<16x128xf32>
    %91 = vector.broadcast %70 : vector<1x128xf32> to vector<16x128xf32>
    %92 = arith.addf %90, %91 : vector<16x128xf32>
    %93 = arith.truncf %92 : vector<16x128xf32> to vector<16x128xbf16>
    %c0_37 = arith.constant 0 : index
    %c0_38 = arith.constant 0 : index
    %94 = vector.load %arg10[%c0_37, %c0_38] : memref<128x256xbf16, #tpu.memory_space<vmem>>, vector<128x256xbf16>
    %cst_39 = arith.constant dense<0.000000e+00> : vector<16x256xf32>
    %95 = tpu.matmul %93, %94, %cst_39 {dimension_numbers = #tpu.dot_dimension_numbers<[1], [0], [0], [1], [0, 0, 1, 1], [], []>} : vector<16x128xbf16>, vector<128x256xbf16>, vector<16x256xf32> -> vector<16x256xf32>
    %c0_40 = arith.constant 0 : index
    %c0_41 = arith.constant 0 : index
    %96 = vector.load %arg11[%c0_40, %c0_41] : memref<1x256xf32, #tpu.memory_space<vmem>>, vector<1x256xf32>
    %97 = vector.broadcast %96 : vector<1x256xf32> to vector<16x256xf32>
    %98 = arith.addf %95, %97 : vector<16x256xf32>
    %cst_42 = arith.constant 5.000000e-01 : f32
    %99 = vector.broadcast %cst_42 : f32 to vector<16x256xf32>
    %100 = arith.mulf %99, %98 : vector<16x256xf32>
    %cst_43 = arith.constant 0.707106769 : f32
    %101 = vector.broadcast %cst_43 : f32 to vector<16x256xf32>
    %102 = arith.mulf %98, %101 : vector<16x256xf32>
    %103 = math.erf %102 : vector<16x256xf32>
    %cst_44 = arith.constant 1.000000e+00 : f32
    %104 = vector.broadcast %cst_44 : f32 to vector<16x256xf32>
    %105 = arith.addf %104, %103 : vector<16x256xf32>
    %106 = arith.mulf %100, %105 : vector<16x256xf32>
    %107 = arith.truncf %106 : vector<16x256xf32> to vector<16x256xbf16>
    %c0_45 = arith.constant 0 : index
    %c0_46 = arith.constant 0 : index
    %108 = vector.load %arg12[%c0_45, %c0_46] : memref<256x128xbf16, #tpu.memory_space<vmem>>, vector<256x128xbf16>
    %cst_47 = arith.constant dense<0.000000e+00> : vector<16x128xf32>
    %109 = tpu.matmul %107, %108, %cst_47 {dimension_numbers = #tpu.dot_dimension_numbers<[1], [0], [0], [1], [0, 0, 1, 1], [], []>} : vector<16x256xbf16>, vector<256x128xbf16>, vector<16x128xf32> -> vector<16x128xf32>
    %c0_48 = arith.constant 0 : index
    %c0_49 = arith.constant 0 : index
    %110 = vector.load %arg13[%c0_48, %c0_49] : memref<1x128xf32, #tpu.memory_space<vmem>>, vector<1x128xf32>
    %111 = vector.broadcast %110 : vector<1x128xf32> to vector<16x128xf32>
    %112 = arith.addf %109, %111 : vector<16x128xf32>
    %113 = arith.addf %68, %112 : vector<16x128xf32>
    %114 = vector.shape_cast %113 : vector<16x128xf32> to vector<2x8x128xf32>
    %c0_50 = arith.constant 0 : index
    %c0_51 = arith.constant 0 : index
    %c0_52 = arith.constant 0 : index
    %115 = vector.load %arg14[%c0_50, %c0_51, %c0_52] : memref<2x8x128xf32, #tpu.memory_space<vmem>>, vector<2x8x128xf32>
    tpu.vector_store %arg14[%c0_50, %c0_51, %c0_52], %114 {strides = array<i32>} : memref<2x8x128xf32, #tpu.memory_space<vmem>>, vector<2x8x128xf32>,
    return
  }
  func.func @transform_0(%arg0: i32) -> (i32, i32, i32) {
    %c0_i32 = arith.constant 0 : i32
    %c0_i32_0 = arith.constant 0 : i32
    %c0_i32_1 = arith.constant 0 : i32
    return %arg0, %c0_i32, %c0_i32_0 : i32, i32, i32
  }
  func.func @transform_1(%arg0: i32) -> (i32, i32) {
    %c0_i32 = arith.constant 0 : i32
    %c0_i32_0 = arith.constant 0 : i32
    %c0_i32_1 = arith.constant 0 : i32
    return %c0_i32, %c0_i32_0 : i32, i32
  }
  func.func @transform_2(%arg0: i32) -> (i32, i32) {
    %c0_i32 = arith.constant 0 : i32
    %c0_i32_0 = arith.constant 0 : i32
    %c0_i32_1 = arith.constant 0 : i32
    return %c0_i32, %c0_i32_0 : i32, i32
  }
  func.func @transform_3(%arg0: i32) -> (i32, i32) {
    %c0_i32 = arith.constant 0 : i32
    %c0_i32_0 = arith.constant 0 : i32
    %c0_i32_1 = arith.constant 0 : i32
    return %c0_i32, %c0_i32_0 : i32, i32
  }
  func.func @transform_4(%arg0: i32) -> (i32, i32) {
    %c0_i32 = arith.constant 0 : i32
    %c0_i32_0 = arith.constant 0 : i32
    %c0_i32_1 = arith.constant 0 : i32
    return %c0_i32, %c0_i32_0 : i32, i32
  }
  func.func @transform_5(%arg0: i32) -> (i32, i32) {
    %c0_i32 = arith.constant 0 : i32
    %c0_i32_0 = arith.constant 0 : i32
    %c0_i32_1 = arith.constant 0 : i32
    return %c0_i32, %c0_i32_0 : i32, i32
  }
  func.func @transform_6(%arg0: i32) -> (i32, i32) {
    %c0_i32 = arith.constant 0 : i32
    %c0_i32_0 = arith.constant 0 : i32
    %c0_i32_1 = arith.constant 0 : i32
    return %c0_i32, %c0_i32_0 : i32, i32
  }
  func.func @transform_7(%arg0: i32) -> (i32, i32) {
    %c0_i32 = arith.constant 0 : i32
    %c0_i32_0 = arith.constant 0 : i32
    %c0_i32_1 = arith.constant 0 : i32
    return %c0_i32, %c0_i32_0 : i32, i32
  }
  func.func @transform_8(%arg0: i32) -> (i32, i32) {
    %c0_i32 = arith.constant 0 : i32
    %c0_i32_0 = arith.constant 0 : i32
    %c0_i32_1 = arith.constant 0 : i32
    return %c0_i32, %c0_i32_0 : i32, i32
  }
  func.func @transform_9(%arg0: i32) -> (i32, i32) {
    %c0_i32 = arith.constant 0 : i32
    %c0_i32_0 = arith.constant 0 : i32
    %c0_i32_1 = arith.constant 0 : i32
    return %c0_i32, %c0_i32_0 : i32, i32
  }
  func.func @transform_10(%arg0: i32) -> (i32, i32) {
    %c0_i32 = arith.constant 0 : i32
    %c0_i32_0 = arith.constant 0 : i32
    %c0_i32_1 = arith.constant 0 : i32
    return %c0_i32, %c0_i32_0 : i32, i32
  }
  func.func @transform_11(%arg0: i32) -> (i32, i32) {
    %c0_i32 = arith.constant 0 : i32
    %c0_i32_0 = arith.constant 0 : i32
    %c0_i32_1 = arith.constant 0 : i32
    return %c0_i32, %c0_i32_0 : i32, i32
  }
  func.func @transform_12(%arg0: i32) -> (i32, i32) {
    %c0_i32 = arith.constant 0 : i32
    %c0_i32_0 = arith.constant 0 : i32
    %c0_i32_1 = arith.constant 0 : i32
    return %c0_i32, %c0_i32_0 : i32, i32
  }
  func.func @transform_13(%arg0: i32) -> (i32, i32, i32) {
    %c0_i32 = arith.constant 0 : i32
    %c0_i32_0 = arith.constant 0 : i32
    %c0_i32_1 = arith.constant 0 : i32
    return %arg0, %c0_i32, %c0_i32_0 : i32, i32, i32
  }
}

</mosaic_0001>

<llo_original>
// kernel: tpu_custom_call.1
$region0: #{tpu_custom_call.1}
  #allocation0 [shape = 'u32[]', space=smem, size = 0x4, offset = 0x4, fixed_abs, tag = 'smem constant byte address 0x4 - core index']
  #allocation1 [shape = 'u32[144,128]{1,0:T(1,128)}', space=vmem, size = 0x12000, scoped, tag = 'internal scratch']
  %s0 = inlined_call_operand.vmem [shape: f32[4,8,128], index: 0, kind: input, shape index: {}]
  %s1 = inlined_call_operand.vmem [shape: f32[1,128], index: 1, kind: input, shape index: {}]
  %s2 = inlined_call_operand.vmem [shape: f32[1,128], index: 2, kind: input, shape index: {}]
  %s3 = inlined_call_operand.vmem [shape: bf16[256,8], index: 3, kind: input, shape index: {}]
  %s4 = inlined_call_operand.vmem [shape: f32[256,1], index: 4, kind: input, shape index: {}]
  %s5 = inlined_call_operand.vmem [shape: bf16[8,256], index: 5, kind: input, shape index: {}]
  %s6 = inlined_call_operand.vmem [shape: f32[8,1], index: 6, kind: input, shape index: {}]
  %s7 = inlined_call_operand.vmem [shape: f32[1,128], index: 7, kind: input, shape index: {}]
  %s8 = inlined_call_operand.vmem [shape: f32[1,128], index: 8, kind: input, shape index: {}]
  %s9 = inlined_call_operand.vmem [shape: bf16[128,256], index: 9, kind: input, shape index: {}]
  %s10 = inlined_call_operand.vmem [shape: f32[1,256], index: 10, kind: input, shape index: {}]
  %s11 = inlined_call_operand.vmem [shape: bf16[256,128], index: 11, kind: input, shape index: {}]
  %s12 = inlined_call_operand.vmem [shape: f32[1,128], index: 12, kind: input, shape index: {}]
  %s13 = inlined_call_operand.hbm [shape: f32[4,8,128], index: 13, kind: output, shape index: {}]
  %s14 = sld [smem:[#allocation0]]
  $region85: #{tpu_custom_call.1} parent=0
    _
  %s16 = ssub.s32 1, %s14
  %s17 = scalar_select 0, %s16, %s14
  $region1: #{tpu_custom_call.1} parent=0
    #allocation2 [shape = 'u8[16384]{0}', space=vmem, size = 0x4000, scoped, tag = 'output window, operand 0']
    #allocation3 [shape = 's32[2]{0}', space=sflag, size = 0x8, scoped, tag = 'scoped memory for tpu_custom_call.1']
    %18 = vsyncpa [#allocation3], 0
    %s19 = scalar_lea.sflag [#allocation3], 1
    %20 = vsyncpa %s19, 0
    loop: start=0, step=1, limit=4
    $region2: #{tpu_custom_call.1} parent=1 // loop_pre_header
      _
    $region3: #{tpu_custom_call.1} parent=1 // loop_header
      %s22 = sphi 0, %s26
      %p23 = scmp.ge.s32.totalorder %s22, 4
      %s32 = sphi 0, %s34
      %s35 = sphi 0, %s32
      %s36 = sphi 0, %s35
      %s52 = sphi 0, %s36
      %s56 = sphi 0, %s56
      %s58 = sphi 0, %s56
      %s59 = sphi 0, %s58
      %s73 = sphi 0, %s59
      %s77 = sphi 0, %s77
      %s79 = sphi 0, %s77
      %s80 = sphi 0, %s79
      %s94 = sphi 0, %s80
      %s98 = sphi 0, %s98
      %s100 = sphi 0, %s98
      %s101 = sphi 0, %s100
      %s115 = sphi 0, %s101
      %s119 = sphi 0, %s119
      %s121 = sphi 0, %s119
      %s122 = sphi 0, %s121
      %s136 = sphi 0, %s122
      %s140 = sphi 0, %s140
      %s142 = sphi 0, %s140
      %s143 = sphi 0, %s142
      %s157 = sphi 0, %s143
      %s161 = sphi 0, %s161
      %s163 = sphi 0, %s161
      %s164 = sphi 0, %s163
      %s178 = sphi 0, %s164
      %s182 = sphi 0, %s182
      %s184 = sphi 0, %s182
      %s185 = sphi 0, %s184
      %s199 = sphi 0, %s185
      %s203 = sphi 0, %s203
      %s205 = sphi 0, %s203
      %s206 = sphi 0, %s205
      %s220 = sphi 0, %s206
      %s224 = sphi 0, %s224
      %s226 = sphi 0, %s224
      %s227 = sphi 0, %s226
      %s241 = sphi 0, %s227
      %s245 = sphi 0, %s245
      %s247 = sphi 0, %s245
      %s248 = sphi 0, %s247
      %s262 = sphi 0, %s248
      %s266 = sphi 0, %s266
      %s268 = sphi 0, %s266
      %s269 = sphi 0, %s268
      %s283 = sphi 0, %s269
      %s287 = sphi 0, %s287
      %s289 = sphi 0, %s287
      %s290 = sphi 0, %s289
      %s304 = sphi 0, %s290
      %s310 = sphi 0, %s312
      %s313 = sphi 0, %s310
      %s314 = sphi 0, %s313
      %s330 = sphi 0, %s314
    $region4: #{tpu_custom_call.1} parent=1 // loop_header_branch
      %25 = sbr.rel (%p23) target = $region8
    $region5: #{tpu_custom_call.1} parent=1 // loop_body
      %s27 = ssub.s32 %s22, 1
      %s28 = ssub.s32 %s22, 2
      %s29 = sadd.s32 %s22, 1
      %s30 = ssub.s32 %s22, %s29
      %p31 = scmp.eq.s32.totalorder %s30, 0
      %s33 = sadd.s32 %s32, 1
      %s34 = scalar_select %p31, %s32, %s33
      %p37 = pneg %p31
      %p38 = scmp.eq.s32.totalorder %s22, 1
      %p39 = por %p37, %p38
      %p40 = scmp.ne.s32.totalorder %s32, %s35
      %p41 = scmp.eq.s32.totalorder %s22, 0
      %p42 = por %p40, %p41
      %p43 = scmp.ne.s32.totalorder %s32, %s35
      %p44 = scmp.eq.s32.totalorder %s27, 1
      %p45 = por %p43, %p44
      %p46 = scmp.ne.s32.totalorder %s35, %s36
      %p47 = scmp.eq.s32.totalorder %s27, 0
      %p48 = por %p46, %p47
      %p49 = scmp.ne.s32.totalorder %s35, %s36
      %p50 = scmp.eq.s32.totalorder %s28, 1
      %p51 = por %p49, %p50
      %p53 = scmp.ne.s32.totalorder %s36, %s52
      %p54 = scmp.eq.s32.totalorder %s28, 0
      %p55 = por %p53, %p54
      %s57 = sadd.s32 %s56, 1
      %p60 = scmp.eq.s32.totalorder %s22, 1
      %p61 = scmp.ne.s32.totalorder %s56, %s58
      %p62 = scmp.eq.s32.totalorder %s22, 0
      %p63 = por %p61, %p62
      %p64 = scmp.ne.s32.totalorder %s56, %s58
      %p65 = scmp.eq.s32.totalorder %s27, 1
      %p66 = por %p64, %p65
      %p67 = scmp.ne.s32.totalorder %s58, %s59
      %p68 = scmp.eq.s32.totalorder %s27, 0
      %p69 = por %p67, %p68
      %p70 = scmp.ne.s32.totalorder %s58, %s59
      %p71 = scmp.eq.s32.totalorder %s28, 1
      %p72 = por %p70, %p71
      %p74 = scmp.ne.s32.totalorder %s59, %s73
      %p75 = scmp.eq.s32.totalorder %s28, 0
      %p76 = por %p74, %p75
      %s78 = sadd.s32 %s77, 1
      %p81 = scmp.eq.s32.totalorder %s22, 1
      %p82 = scmp.ne.s32.totalorder %s77, %s79
      %p83 = scmp.eq.s32.totalorder %s22, 0
      %p84 = por %p82, %p83
      %p85 = scmp.ne.s32.totalorder %s77, %s79
      %p86 = scmp.eq.s32.totalorder %s27, 1
      %p87 = por %p85, %p86
      %p88 = scmp.ne.s32.totalorder %s79, %s80
      %p89 = scmp.eq.s32.totalorder %s27, 0
      %p90 = por %p88, %p89
      %p91 = scmp.ne.s32.totalorder %s79, %s80
      %p92 = scmp.eq.s32.totalorder %s28, 1
      %p93 = por %p91, %p92
      %p95 = scmp.ne.s32.totalorder %s80, %s94
      %p96 = scmp.eq.s32.totalorder %s28, 0
      %p97 = por %p95, %p96
      %s99 = sadd.s32 %s98, 1
      %p102 = scmp.eq.s32.totalorder %s22, 1
      %p103 = scmp.ne.s32.totalorder %s98, %s100
      %p104 = scmp.eq.s32.totalorder %s22, 0
      %p105 = por %p103, %p104
      %p106 = scmp.ne.s32.totalorder %s98, %s100
      %p107 = scmp.eq.s32.totalorder %s27, 1
      %p108 = por %p106, %p107
      %p109 = scmp.ne.s32.totalorder %s100, %s101
      %p110 = scmp.eq.s32.totalorder %s27, 0
      %p111 = por %p109, %p110
      %p112 = scmp.ne.s32.totalorder %s100, %s101
      %p113 = scmp.eq.s32.totalorder %s28, 1
      %p114 = por %p112, %p113
      %p116 = scmp.ne.s32.totalorder %s101, %s115
      %p117 = scmp.eq.s32.totalorder %s28, 0
      %p118 = por %p116, %p117
      %s120 = sadd.s32 %s119, 1
      %p123 = scmp.eq.s32.totalorder %s22, 1
      %p124 = scmp.ne.s32.totalorder %s119, %s121
      %p125 = scmp.eq.s32.totalorder %s22, 0
      %p126 = por %p124, %p125
      %p127 = scmp.ne.s32.totalorder %s119, %s121
      %p128 = scmp.eq.s32.totalorder %s27, 1
      %p129 = por %p127, %p128
      %p130 = scmp.ne.s32.totalorder %s121, %s122
      %p131 = scmp.eq.s32.totalorder %s27, 0
      %p132 = por %p130, %p131
      %p133 = scmp.ne.s32.totalorder %s121, %s122
      %p134 = scmp.eq.s32.totalorder %s28, 1
      %p135 = por %p133, %p134
      %p137 = scmp.ne.s32.totalorder %s122, %s136
      %p138 = scmp.eq.s32.totalorder %s28, 0
      %p139 = por %p137, %p138
      %s141 = sadd.s32 %s140, 1
      %p144 = scmp.eq.s32.totalorder %s22, 1
      %p145 = scmp.ne.s32.totalorder %s140, %s142
      %p146 = scmp.eq.s32.totalorder %s22, 0
      %p147 = por %p145, %p146
      %p148 = scmp.ne.s32.totalorder %s140, %s142
      %p149 = scmp.eq.s32.totalorder %s27, 1
      %p150 = por %p148, %p149
      %p151 = scmp.ne.s32.totalorder %s142, %s143
      %p152 = scmp.eq.s32.totalorder %s27, 0
      %p153 = por %p151, %p152
      %p154 = scmp.ne.s32.totalorder %s142, %s143
      %p155 = scmp.eq.s32.totalorder %s28, 1
      %p156 = por %p154, %p155
      %p158 = scmp.ne.s32.totalorder %s143, %s157
      %p159 = scmp.eq.s32.totalorder %s28, 0
      %p160 = por %p158, %p159
      %s162 = sadd.s32 %s161, 1
      %p165 = scmp.eq.s32.totalorder %s22, 1
      %p166 = scmp.ne.s32.totalorder %s161, %s163
      %p167 = scmp.eq.s32.totalorder %s22, 0
      %p168 = por %p166, %p167
      %p169 = scmp.ne.s32.totalorder %s161, %s163
      %p170 = scmp.eq.s32.totalorder %s27, 1
      %p171 = por %p169, %p170
      %p172 = scmp.ne.s32.totalorder %s163, %s164
      %p173 = scmp.eq.s32.totalorder %s27, 0
      %p174 = por %p172, %p173
      %p175 = scmp.ne.s32.totalorder %s163, %s164
      %p176 = scmp.eq.s32.totalorder %s28, 1
      %p177 = por %p175, %p176
      %p179 = scmp.ne.s32.totalorder %s164, %s178
      %p180 = scmp.eq.s32.totalorder %s28, 0
      %p181 = por %p179, %p180
      %s183 = sadd.s32 %s182, 1
      %p186 = scmp.eq.s32.totalorder %s22, 1
      %p187 = scmp.ne.s32.totalorder %s182, %s184
      %p188 = scmp.eq.s32.totalorder %s22, 0
      %p189 = por %p187, %p188
      %p190 = scmp.ne.s32.totalorder %s182, %s184
      %p191 = scmp.eq.s32.totalorder %s27, 1
      %p192 = por %p190, %p191
      %p193 = scmp.ne.s32.totalorder %s184, %s185
      %p194 = scmp.eq.s32.totalorder %s27, 0
      %p195 = por %p193, %p194
      %p196 = scmp.ne.s32.totalorder %s184, %s185
      %p197 = scmp.eq.s32.totalorder %s28, 1
      %p198 = por %p196, %p197
      %p200 = scmp.ne.s32.totalorder %s185, %s199
      %p201 = scmp.eq.s32.totalorder %s28, 0
      %p202 = por %p200, %p201
      %s204 = sadd.s32 %s203, 1
      %p207 = scmp.eq.s32.totalorder %s22, 1
      %p208 = scmp.ne.s32.totalorder %s203, %s205
      %p209 = scmp.eq.s32.totalorder %s22, 0
      %p210 = por %p208, %p209
      %p211 = scmp.ne.s32.totalorder %s203, %s205
      %p212 = scmp.eq.s32.totalorder %s27, 1
      %p213 = por %p211, %p212
      %p214 = scmp.ne.s32.totalorder %s205, %s206
      %p215 = scmp.eq.s32.totalorder %s27, 0
      %p216 = por %p214, %p215
      %p217 = scmp.ne.s32.totalorder %s205, %s206
      %p218 = scmp.eq.s32.totalorder %s28, 1
      %p219 = por %p217, %p218
      %p221 = scmp.ne.s32.totalorder %s206, %s220
      %p222 = scmp.eq.s32.totalorder %s28, 0
      %p223 = por %p221, %p222
      %s225 = sadd.s32 %s224, 1
      %p228 = scmp.eq.s32.totalorder %s22, 1
      %p229 = scmp.ne.s32.totalorder %s224, %s226
      %p230 = scmp.eq.s32.totalorder %s22, 0
      %p231 = por %p229, %p230
      %p232 = scmp.ne.s32.totalorder %s224, %s226
      %p233 = scmp.eq.s32.totalorder %s27, 1
      %p234 = por %p232, %p233
      %p235 = scmp.ne.s32.totalorder %s226, %s227
      %p236 = scmp.eq.s32.totalorder %s27, 0
      %p237 = por %p235, %p236
      %p238 = scmp.ne.s32.totalorder %s226, %s227
      %p239 = scmp.eq.s32.totalorder %s28, 1
      %p240 = por %p238, %p239
      %p242 = scmp.ne.s32.totalorder %s227, %s241
      %p243 = scmp.eq.s32.totalorder %s28, 0
      %p244 = por %p242, %p243
      %s246 = sadd.s32 %s245, 1
      %p249 = scmp.eq.s32.totalorder %s22, 1
      %p250 = scmp.ne.s32.totalorder %s245, %s247
      %p251 = scmp.eq.s32.totalorder %s22, 0
      %p252 = por %p250, %p251
      %p253 = scmp.ne.s32.totalorder %s245, %s247
      %p254 = scmp.eq.s32.totalorder %s27, 1
      %p255 = por %p253, %p254
      %p256 = scmp.ne.s32.totalorder %s247, %s248
      %p257 = scmp.eq.s32.totalorder %s27, 0
      %p258 = por %p256, %p257
      %p259 = scmp.ne.s32.totalorder %s247, %s248
      %p260 = scmp.eq.s32.totalorder %s28, 1
      %p261 = por %p259, %p260
      %p263 = scmp.ne.s32.totalorder %s248, %s262
      %p264 = scmp.eq.s32.totalorder %s28, 0
      %p265 = por %p263, %p264
      %s267 = sadd.s32 %s266, 1
      %p270 = scmp.eq.s32.totalorder %s22, 1
      %p271 = scmp.ne.s32.totalorder %s266, %s268
      %p272 = scmp.eq.s32.totalorder %s22, 0
      %p273 = por %p271, %p272
      %p274 = scmp.ne.s32.totalorder %s266, %s268
      %p275 = scmp.eq.s32.totalorder %s27, 1
      %p276 = por %p274, %p275
      %p277 = scmp.ne.s32.totalorder %s268, %s269
      %p278 = scmp.eq.s32.totalorder %s27, 0
      %p279 = por %p277, %p278
      %p280 = scmp.ne.s32.totalorder %s268, %s269
      %p281 = scmp.eq.s32.totalorder %s28, 1
      %p282 = por %p280, %p281
      %p284 = scmp.ne.s32.totalorder %s269, %s283
      %p285 = scmp.eq.s32.totalorder %s28, 0
      %p286 = por %p284, %p285
      %s288 = sadd.s32 %s287, 1
      %p291 = scmp.eq.s32.totalorder %s22, 1
      %p292 = scmp.ne.s32.totalorder %s287, %s289
      %p293 = scmp.eq.s32.totalorder %s22, 0
      %p294 = por %p292, %p293
      %p295 = scmp.ne.s32.totalorder %s287, %s289
      %p296 = scmp.eq.s32.totalorder %s27, 1
      %p297 = por %p295, %p296
      %p298 = scmp.ne.s32.totalorder %s289, %s290
      %p299 = scmp.eq.s32.totalorder %s27, 0
      %p300 = por %p298, %p299
      %p301 = scmp.ne.s32.totalorder %s289, %s290
      %p302 = scmp.eq.s32.totalorder %s28, 1
      %p303 = por %p301, %p302
      %p305 = scmp.ne.s32.totalorder %s290, %s304
      %p306 = scmp.eq.s32.totalorder %s28, 0
      %p307 = por %p305, %p306
      %s308 = ssub.s32 %s22, %s29
      %p309 = scmp.eq.s32.totalorder %s308, 0
      %s311 = sadd.s32 %s310, 1
      %s312 = scalar_select %p309, %s310, %s311
      %p315 = pneg %p309
      %p316 = scmp.eq.s32.totalorder %s22, 1
      %p317 = por %p315, %p316
      %p318 = scmp.ne.s32.totalorder %s310, %s313
      %p319 = scmp.eq.s32.totalorder %s22, 0
      %p320 = por %p318, %p319
      %p321 = scmp.ne.s32.totalorder %s310, %s313
      %p322 = scmp.eq.s32.totalorder %s27, 1
      %p323 = por %p321, %p322
      %p324 = scmp.ne.s32.totalorder %s313, %s314
      %p325 = scmp.eq.s32.totalorder %s27, 0
      %p326 = por %p324, %p325
      %p327 = scmp.ne.s32.totalorder %s313, %s314
      %p328 = scmp.eq.s32.totalorder %s28, 1
      %p329 = por %p327, %p328
      %p331 = scmp.ne.s32.totalorder %s314, %s330
      %p332 = scmp.eq.s32.totalorder %s28, 0
      %p333 = por %p331, %p332
      %p334 = scmp.le.s32.totalorder 1, %s22
      %p335 = scmp.lt.s32.totalorder %s22, 3
      %p336 = pnand %p334, %p335
      %p337 = pneg %p336
      // Predicated region
      $region9: #{tpu_custom_call.1} parent=5 // pred_check
        _
      $region10: #{tpu_custom_call.1} parent=5 // pred_check_branch
        %339 = sbr.rel (%p336) target = $region12
      $region11: #{tpu_custom_call.1} parent=5 // pred_region
        %s340 = ssub.s32 %s22, 1
        // Predicated region
        $region13: #{tpu_custom_call.1} parent=11 // pred_check
          %p341 = pneg %p69
        $region14: #{tpu_custom_call.1} parent=11 // pred_check_branch
          %343 = sbr.rel (%p341) target = $region16
        $region15: #{tpu_custom_call.1} parent=11 // pred_region
          _
        $region16: #{tpu_custom_call.1} parent=11 // pred_fallthru
          _
        // Predicated region
        $region17: #{tpu_custom_call.1} parent=11 // pred_check
          %p344 = pneg %p90
        $region18: #{tpu_custom_call.1} parent=11 // pred_check_branch
          %346 = sbr.rel (%p344) target = $region20
        $region19: #{tpu_custom_call.1} parent=11 // pred_region
          _
        $region20: #{tpu_custom_call.1} parent=11 // pred_fallthru
          _
        // Predicated region
        $region21: #{tpu_custom_call.1} parent=11 // pred_check
          %p347 = pneg %p111
        $region22: #{tpu_custom_call.1} parent=11 // pred_check_branch
          %349 = sbr.rel (%p347) target = $region24
        $region23: #{tpu_custom_call.1} parent=11 // pred_region
          _
        $region24: #{tpu_custom_call.1} parent=11 // pred_fallthru
          _
        // Predicated region
        $region25: #{tpu_custom_call.1} parent=11 // pred_check
          %p350 = pneg %p132
        $region26: #{tpu_custom_call.1} parent=11 // pred_check_branch
          %352 = sbr.rel (%p350) target = $region28
        $region27: #{tpu_custom_call.1} parent=11 // pred_region
          _
        $region28: #{tpu_custom_call.1} parent=11 // pred_fallthru
          _
        // Predicated region
        $region29: #{tpu_custom_call.1} parent=11 // pred_check
          %p353 = pneg %p153
        $region30: #{tpu_custom_call.1} parent=11 // pred_check_branch
          %355 = sbr.rel (%p353) target = $region32
        $region31: #{tpu_custom_call.1} parent=11 // pred_region
          _
        $region32: #{tpu_custom_call.1} parent=11 // pred_fallthru
          _
        // Predicated region
        $region33: #{tpu_custom_call.1} parent=11 // pred_check
          %p356 = pneg %p174
        $region34: #{tpu_custom_call.1} parent=11 // pred_check_branch
          %358 = sbr.rel (%p356) target = $region36
        $region35: #{tpu_custom_call.1} parent=11 // pred_region
          _
        $region36: #{tpu_custom_call.1} parent=11 // pred_fallthru
          _
        // Predicated region
        $region37: #{tpu_custom_call.1} parent=11 // pred_check
          %p359 = pneg %p195
        $region38: #{tpu_custom_call.1} parent=11 // pred_check_branch
          %361 = sbr.rel (%p359) target = $region40
        $region39: #{tpu_custom_call.1} parent=11 // pred_region
          _
        $region40: #{tpu_custom_call.1} parent=11 // pred_fallthru
          _
        // Predicated region
        $region41: #{tpu_custom_call.1} parent=11 // pred_check
          %p362 = pneg %p216
        $region42: #{tpu_custom_call.1} parent=11 // pred_check_branch
          %364 = sbr.rel (%p362) target = $region44
        $region43: #{tpu_custom_call.1} parent=11 // pred_region
          _
        $region44: #{tpu_custom_call.1} parent=11 // pred_fallthru
          _
        // Predicated region
        $region45: #{tpu_custom_call.1} parent=11 // pred_check
          %p365 = pneg %p237
        $region46: #{tpu_custom_call.1} parent=11 // pred_check_branch
          %367 = sbr.rel (%p365) target = $region48
        $region47: #{tpu_custom_call.1} parent=11 // pred_region
          _
        $region48: #{tpu_custom_call.1} parent=11 // pred_fallthru
          _
        // Predicated region
        $region49: #{tpu_custom_call.1} parent=11 // pred_check
          %p368 = pneg %p258
        $region50: #{tpu_custom_call.1} parent=11 // pred_check_branch
          %370 = sbr.rel (%p368) target = $region52
        $region51: #{tpu_custom_call.1} parent=11 // pred_region
          _
        $region52: #{tpu_custom_call.1} parent=11 // pred_fallthru
          _
        // Predicated region
        $region53: #{tpu_custom_call.1} parent=11 // pred_check
          %p371 = pneg %p279
        $region54: #{tpu_custom_call.1} parent=11 // pred_check_branch
          %373 = sbr.rel (%p371) target = $region56
        $region55: #{tpu_custom_call.1} parent=11 // pred_region
          _
        $region56: #{tpu_custom_call.1} parent=11 // pred_fallthru
          _
        // Predicated region
        $region57: #{tpu_custom_call.1} parent=11 // pred_check
          %p374 = pneg %p300
        $region58: #{tpu_custom_call.1} parent=11 // pred_check_branch
          %376 = sbr.rel (%p374) target = $region60
        $region59: #{tpu_custom_call.1} parent=11 // pred_region
          _
        $region60: #{tpu_custom_call.1} parent=11 // pred_fallthru
          _
      $region12: #{tpu_custom_call.1} parent=5 // pred_fallthru
        _
      %p377 = scmp.lt.s32.totalorder %s22, 2
      // Predicated region
      $region61: #{tpu_custom_call.1} parent=5 // pred_check
        %p378 = pneg %p377
      $region62: #{tpu_custom_call.1} parent=5 // pred_check_branch
        %380 = sbr.rel (%p378) target = $region64
      $region63: #{tpu_custom_call.1} parent=5 // pred_region
        // Predicated region
        $region65: #{tpu_custom_call.1} parent=63 // pred_check
          %p381 = pneg %p42
        $region66: #{tpu_custom_call.1} parent=63 // pred_check_branch
          %383 = sbr.rel (%p381) target = $region68
        $region67: #{tpu_custom_call.1} parent=63 // pred_region
          %s384 = smul.u32 2, %s22
          %p385 = scmp.lt.s32.totalorder %s384, 3
          %s386 = scalar_select %p385, %s384, 3
          %s387 = smul.addr %s386, 8
          %s388 = scalar_lea.vmem %s0, %s387
          %s389 = smul.u32 2, %s22
        $region68: #{tpu_custom_call.1} parent=63 // pred_fallthru
          _
      $region64: #{tpu_custom_call.1} parent=5 // pred_fallthru
        _
      %p390 = scmp.le.s32.totalorder 1, %s22
      %p391 = scmp.lt.s32.totalorder %s22, 3
      %p392 = pnand %p390, %p391
      %p393 = pneg %p392
      // Predicated region
      $region69: #{tpu_custom_call.1} parent=5 // pred_check
        _
      $region70: #{tpu_custom_call.1} parent=5 // pred_check_branch
        %395 = sbr.rel (%p392) target = $region72
      $region71: #{tpu_custom_call.1} parent=5 // pred_region
        %s396 = ssub.s32 %s22, 1
        %s397 = smul.u32 2, %s27
        %p398 = scmp.lt.s32.totalorder %s397, 3
        %s399 = scalar_select %p398, %s397, 3
        %s400 = smul.addr %s399, 8
        %s401 = scalar_lea.vmem %s0, %s400
        %p402 = pneg %p48
        %p403 = pneg %p45
        %p404 = pneg %p69
        %p405 = pneg %p66
        %p406 = pneg %p90
        %p407 = pneg %p87
        %p408 = pneg %p111
        %p409 = pneg %p108
        %p410 = pneg %p132
        %p411 = pneg %p129
        %p412 = pneg %p153
        %p413 = pneg %p150
        %p414 = pneg %p174
        %p415 = pneg %p171
        %p416 = pneg %p195
        %p417 = pneg %p192
        %p418 = pneg %p216
        %p419 = pneg %p213
        %p420 = pneg %p237
        %p421 = pneg %p234
        %p422 = pneg %p258
        %p423 = pneg %p255
        %p424 = pneg %p279
        %p425 = pneg %p276
        %p426 = pneg %p300
        %p427 = pneg %p297
        %p428 = pneg %p326
        %p429 = pneg %p323
        %s430 = sand.u32 %s313, 1
        %s431 = scalar_lea.sflag [#allocation3], %s430
        %s432 = sand.u32 %s313, 1
        %s433 = smul.addr %s432, 16
        %s434 = scalar_lea.vmem [#allocation2], %s433
        %s435 = smul.u32 2, %s27
        %p436 = scmp.lt.s32.totalorder %s435, 3
        %s437 = scalar_select %p436, %s435, 3
        %s438 = smul.addr %s437, 8
        %s439 = scalar_lea.vmem %s0, %s438
        %s440 = smul.u32 2, %s27
        %s441 = smul.u32 2, %s27
        %v443 = vld [vmem:[%s439] sm:$0xff]
        %v444 = vld [vmem:[%s439 + $0x8] sm:$0xff]
        %v445 = vld [vmem:[%s1] sm:$0x1]
        %v446 = vld [vmem:[%s2] sm:$0x1]
        %447 = vadd.xlane.f32.xlu0 %v443
        %v448 = vpop.xlane.xlu0 %447
        %449 = vadd.xlane.f32.xlu0 %v444
        %v450 = vpop.xlane.xlu0 %449
        %v451 = vrcp.pop 128.0
        %v452 = vmul.f32 %v448, %v451
        %v453 = vmul.f32 %v450, %v451
        %v454 = vsub.f32 %v443, %v452
        %v455 = vsub.f32 %v444, %v453
        %v456 = vmul.f32 %v454, %v454
        %v457 = vmul.f32 %v455, %v455
        %458 = vadd.xlane.f32.xlu0 %v456
        %v459 = vpop.xlane.xlu0 %458
        %460 = vadd.xlane.f32.xlu0 %v457
        %v461 = vpop.xlane.xlu0 %460
        %v462 = vmul.f32 %v459, %v451
        %v463 = vmul.f32 %v461, %v451
        %v464 = vadd.f32 %v462, 1e-05
        %v465 = vadd.f32 %v463, 1e-05
        %v466 = vrsqrt.pop %v464
        %v467 = vrsqrt.pop %v465
        %v468 = vmul.f32 %v454, %v466
        %v469 = vmul.f32 %v455, %v467
        %v471 = vlaneseq
        %v472 = vshrl.u32 %v471, 7
        %v473 = vsub.s32 0, %v472
        %v474 = vrot.slane %v445, %v473
        %v476 = vmul.f32 %v468, %v474
        %v477 = vmul.f32 %v469, %v474
        %v479 = vlaneseq
        %v480 = vshrl.u32 %v479, 7
        %v481 = vsub.s32 0, %v480
        %v482 = vrot.slane %v446, %v481
        %v484 = vadd.f32 %v476, %v482
        %v485 = vadd.f32 %v477, %v482
        %v486 = vld [vmem:[%s3] sm:$0xf]
        %v487 = vld [vmem:[%s3 + $0x4] sm:$0xf]
        %v488 = vld [vmem:[%s3 + $0x8] sm:$0xf]
        %v489 = vld [vmem:[%s3 + $0xc] sm:$0xf]
        %v490 = vld [vmem:[%s3 + $0x10] sm:$0xf]
        %v491 = vld [vmem:[%s3 + $0x14] sm:$0xf]
        %v492 = vld [vmem:[%s3 + $0x18] sm:$0xf]
        %v493 = vld [vmem:[%s3 + $0x1c] sm:$0xf]
        %v494 = vld [vmem:[%s3 + $0x20] sm:$0xf]
        %v495 = vld [vmem:[%s3 + $0x24] sm:$0xf]
        %v496 = vld [vmem:[%s3 + $0x28] sm:$0xf]
        %v497 = vld [vmem:[%s3 + $0x2c] sm:$0xf]
        %v498 = vld [vmem:[%s3 + $0x30] sm:$0xf]
        %v499 = vld [vmem:[%s3 + $0x34] sm:$0xf]
        %v500 = vld [vmem:[%s3 + $0x38] sm:$0xf]
        %v501 = vld [vmem:[%s3 + $0x3c] sm:$0xf]
        %v502 = vld [vmem:[%s3 + $0x40] sm:$0xf]
        %v503 = vld [vmem:[%s3 + $0x44] sm:$0xf]
        %v504 = vld [vmem:[%s3 + $0x48] sm:$0xf]
        %v505 = vld [vmem:[%s3 + $0x4c] sm:$0xf]
        %v506 = vld [vmem:[%s3 + $0x50] sm:$0xf]
        %v507 = vld [vmem:[%s3 + $0x54] sm:$0xf]
        %v508 = vld [vmem:[%s3 + $0x58] sm:$0xf]
        %v509 = vld [vmem:[%s3 + $0x5c] sm:$0xf]
        %v510 = vld [vmem:[%s3 + $0x60] sm:$0xf]
        %v511 = vld [vmem:[%s3 + $0x64] sm:$0xf]
        %v512 = vld [vmem:[%s3 + $0x68] sm:$0xf]
        %v513 = vld [vmem:[%s3 + $0x6c] sm:$0xf]
        %v514 = vld [vmem:[%s3 + $0x70] sm:$0xf]
        %v515 = vld [vmem:[%s3 + $0x74] sm:$0xf]
        %v516 = vld [vmem:[%s3 + $0x78] sm:$0xf]
        %v517 = vld [vmem:[%s3 + $0x7c] sm:$0xf]
        %v518 = vld [vmem:[%s5] sm:$0xff]
        %v519 = vld [vmem:[%s4] sm:$0xff]
        %v520 = vld [vmem:[%s4 + $0x8] sm:$0xff]
        %v521 = vld [vmem:[%s4 + $0x10] sm:$0xff]
        %v522 = vld [vmem:[%s4 + $0x18] sm:$0xff]
        %v523 = vld [vmem:[%s4 + $0x20] sm:$0xff]
        %v524 = vld [vmem:[%s4 + $0x28] sm:$0xff]
        %v525 = vld [vmem:[%s4 + $0x30] sm:$0xff]
        %v526 = vld [vmem:[%s4 + $0x38] sm:$0xff]
        %v527 = vld [vmem:[%s4 + $0x40] sm:$0xff]
        %v528 = vld [vmem:[%s4 + $0x48] sm:$0xff]
        %v529 = vld [vmem:[%s4 + $0x50] sm:$0xff]
        %v530 = vld [vmem:[%s4 + $0x58] sm:$0xff]
        %v531 = vld [vmem:[%s4 + $0x60] sm:$0xff]
        %v532 = vld [vmem:[%s4 + $0x68] sm:$0xff]
        %v533 = vld [vmem:[%s4 + $0x70] sm:$0xff]
        %v534 = vld [vmem:[%s4 + $0x78] sm:$0xff]
        %v535 = vld [vmem:[%s4 + $0x80] sm:$0xff]
        %v536 = vld [vmem:[%s4 + $0x88] sm:$0xff]
        %v537 = vld [vmem:[%s4 + $0x90] sm:$0xff]
        %v538 = vld [vmem:[%s4 + $0x98] sm:$0xff]
        %v539 = vld [vmem:[%s4 + $0xa0] sm:$0xff]
        %v540 = vld [vmem:[%s4 + $0xa8] sm:$0xff]
        %v541 = vld [vmem:[%s4 + $0xb0] sm:$0xff]
        %v542 = vld [vmem:[%s4 + $0xb8] sm:$0xff]
        %v543 = vld [vmem:[%s4 + $0xc0] sm:$0xff]
        %v544 = vld [vmem:[%s4 + $0xc8] sm:$0xff]
        %v545 = vld [vmem:[%s4 + $0xd0] sm:$0xff]
        %v546 = vld [vmem:[%s4 + $0xd8] sm:$0xff]
        %v547 = vld [vmem:[%s4 + $0xe0] sm:$0xff]
        %v548 = vld [vmem:[%s4 + $0xe8] sm:$0xff]
        %v549 = vld [vmem:[%s4 + $0xf0] sm:$0xff]
        %v550 = vld [vmem:[%s4 + $0xf8] sm:$0xff]
        %v551 = vld [vmem:[%s6] sm:$0xff]
        %v552 = vpack.c.bf16 %v484, %v484
        %554 = vset.pattern.permute.xlu0 0
        %555 = vperm.xlu0 %554, %v519
        %v556 = vpop.permute.xlu0 %555
        %559 = vset.pattern.permute.xlu0 0
        %560 = vperm.xlu0 %559, %v520
        %v561 = vpop.permute.xlu0 %560
        %564 = vset.pattern.permute.xlu0 0
        %565 = vperm.xlu0 %564, %v521
        %v566 = vpop.permute.xlu0 %565
        %569 = vset.pattern.permute.xlu0 0
        %570 = vperm.xlu0 %569, %v522
        %v571 = vpop.permute.xlu0 %570
        %574 = vset.pattern.permute.xlu0 0
        %575 = vperm.xlu0 %574, %v523
        %v576 = vpop.permute.xlu0 %575
        %579 = vset.pattern.permute.xlu0 0
        %580 = vperm.xlu0 %579, %v524
        %v581 = vpop.permute.xlu0 %580
        %584 = vset.pattern.permute.xlu0 0
        %585 = vperm.xlu0 %584, %v525
        %v586 = vpop.permute.xlu0 %585
        %589 = vset.pattern.permute.xlu0 0
        %590 = vperm.xlu0 %589, %v526
        %v591 = vpop.permute.xlu0 %590
        %594 = vset.pattern.permute.xlu0 0
        %595 = vperm.xlu0 %594, %v527
        %v596 = vpop.permute.xlu0 %595
        %599 = vset.pattern.permute.xlu0 0
        %600 = vperm.xlu0 %599, %v528
        %v601 = vpop.permute.xlu0 %600
        %604 = vset.pattern.permute.xlu0 0
        %605 = vperm.xlu0 %604, %v529
        %v606 = vpop.permute.xlu0 %605
        %609 = vset.pattern.permute.xlu0 0
        %610 = vperm.xlu0 %609, %v530
        %v611 = vpop.permute.xlu0 %610
        %614 = vset.pattern.permute.xlu0 0
        %615 = vperm.xlu0 %614, %v531
        %v616 = vpop.permute.xlu0 %615
        %619 = vset.pattern.permute.xlu0 0
        %620 = vperm.xlu0 %619, %v532
        %v621 = vpop.permute.xlu0 %620
        %624 = vset.pattern.permute.xlu0 0
        %625 = vperm.xlu0 %624, %v533
        %v626 = vpop.permute.xlu0 %625
        %629 = vset.pattern.permute.xlu0 0
        %630 = vperm.xlu0 %629, %v534
        %v631 = vpop.permute.xlu0 %630
        %634 = vset.pattern.permute.xlu0 0
        %635 = vperm.xlu0 %634, %v535
        %v636 = vpop.permute.xlu0 %635
        %639 = vset.pattern.permute.xlu0 0
        %640 = vperm.xlu0 %639, %v536
        %v641 = vpop.permute.xlu0 %640
        %644 = vset.pattern.permute.xlu0 0
        %645 = vperm.xlu0 %644, %v537
        %v646 = vpop.permute.xlu0 %645
        %649 = vset.pattern.permute.xlu0 0
        %650 = vperm.xlu0 %649, %v538
        %v651 = vpop.permute.xlu0 %650
        %654 = vset.pattern.permute.xlu0 0
        %655 = vperm.xlu0 %654, %v539
        %v656 = vpop.permute.xlu0 %655
        %659 = vset.pattern.permute.xlu0 0
        %660 = vperm.xlu0 %659, %v540
        %v661 = vpop.permute.xlu0 %660
        %664 = vset.pattern.permute.xlu0 0
        %665 = vperm.xlu0 %664, %v541
        %v666 = vpop.permute.xlu0 %665
        %669 = vset.pattern.permute.xlu0 0
        %670 = vperm.xlu0 %669, %v542
        %v671 = vpop.permute.xlu0 %670
        %674 = vset.pattern.permute.xlu0 0
        %675 = vperm.xlu0 %674, %v543
        %v676 = vpop.permute.xlu0 %675
        %679 = vset.pattern.permute.xlu0 0
        %680 = vperm.xlu0 %679, %v544
        %v681 = vpop.permute.xlu0 %680
        %684 = vset.pattern.permute.xlu0 0
        %685 = vperm.xlu0 %684, %v545
        %v686 = vpop.permute.xlu0 %685
        %689 = vset.pattern.permute.xlu0 0
        %690 = vperm.xlu0 %689, %v546
        %v691 = vpop.permute.xlu0 %690
        %694 = vset.pattern.permute.xlu0 0
        %695 = vperm.xlu0 %694, %v547
        %v696 = vpop.permute.xlu0 %695
        %699 = vset.pattern.permute.xlu0 0
        %700 = vperm.xlu0 %699, %v548
        %v701 = vpop.permute.xlu0 %700
        %704 = vset.pattern.permute.xlu0 0
        %705 = vperm.xlu0 %704, %v549
        %v706 = vpop.permute.xlu0 %705
        %709 = vset.pattern.permute.xlu0 0
        %710 = vperm.xlu0 %709, %v550
        %v711 = vpop.permute.xlu0 %710
        %v745 = vunpack.c.l.b16 %v486
        %v746 = vunpack.c.l.b16 %v487
        %v747 = vunpack.c.l.b16 %v488
        %v748 = vunpack.c.l.b16 %v489
        %v749 = vunpack.c.l.b16 %v490
        %v750 = vunpack.c.l.b16 %v491
        %v751 = vunpack.c.l.b16 %v492
        %v752 = vunpack.c.l.b16 %v493
        %v753 = vunpack.c.l.b16 %v494
        %v754 = vunpack.c.l.b16 %v495
        %v755 = vunpack.c.l.b16 %v496
        %v756 = vunpack.c.l.b16 %v497
        %v757 = vunpack.c.l.b16 %v498
        %v758 = vunpack.c.l.b16 %v499
        %v759 = vunpack.c.l.b16 %v500
        %v760 = vunpack.c.l.b16 %v501
        %v761 = vunpack.c.l.b16 %v502
        %v762 = vunpack.c.l.b16 %v503
        %v763 = vunpack.c.l.b16 %v504
        %v764 = vunpack.c.l.b16 %v505
        %v765 = vunpack.c.l.b16 %v506
        %v766 = vunpack.c.l.b16 %v507
        %v767 = vunpack.c.l.b16 %v508
        %v768 = vunpack.c.l.b16 %v509
        %v769 = vunpack.c.l.b16 %v510
        %v770 = vunpack.c.l.b16 %v511
        %v771 = vunpack.c.l.b16 %v512
        %v772 = vunpack.c.l.b16 %v513
        %v773 = vunpack.c.l.b16 %v514
        %v774 = vunpack.c.l.b16 %v515
        %v775 = vunpack.c.l.b16 %v516
        %v776 = vunpack.c.l.b16 %v517
        %v777 = vpack.c.b16 %v746, %v745
        %v778 = vpack.c.b16 %v748, %v747
        %v779 = vpack.c.b16 %v750, %v749
        %v780 = vpack.c.b16 %v752, %v751
        %v781 = vpack.c.b16 %v754, %v753
        %v782 = vpack.c.b16 %v756, %v755
        %v783 = vpack.c.b16 %v758, %v757
        %v784 = vpack.c.b16 %v760, %v759
        %v785 = vpack.c.b16 %v762, %v761
        %v786 = vpack.c.b16 %v764, %v763
        %v787 = vpack.c.b16 %v766, %v765
        %v788 = vpack.c.b16 %v768, %v767
        %v789 = vpack.c.b16 %v770, %v769
        %v790 = vpack.c.b16 %v772, %v771
        %v791 = vpack.c.b16 %v774, %v773
        %v792 = vpack.c.b16 %v776, %v775
        %vm793 = vcmask 64512
        %v795 = vsel %vm793, %v777, 0
        %v798 = vsel %vm793, %v778, 0
        %v801 = vsel %vm793, %v779, 0
        %v804 = vsel %vm793, %v780, 0
        %v807 = vsel %vm793, %v781, 0
        %v810 = vsel %vm793, %v782, 0
        %v813 = vsel %vm793, %v783, 0
        %v816 = vsel %vm793, %v784, 0
        %v819 = vsel %vm793, %v785, 0
        %v822 = vsel %vm793, %v786, 0
        %v825 = vsel %vm793, %v787, 0
        %v828 = vsel %vm793, %v788, 0
        %v831 = vsel %vm793, %v789, 0
        %v834 = vsel %vm793, %v790, 0
        %v837 = vsel %vm793, %v791, 0
        %v840 = vsel %vm793, %v792, 0
        %vm842 = vcmask 1043456
        %v844 = vsel %vm842, %v552, 0
        %846 = vmatprep.subr.bf16.mxu0 0
        %847 = vmatpush1.bf16.msra.mxu0 %v844
        %848 = vmatprep.subr.bf16.mxu0 0
        %849 = vmatpush1.bf16.msra.mxu0 0
        %850 = vmatprep.subr.bf16.mxu0 0
        %851 = vmatpush1.bf16.msra.mxu0 0
        %852 = vmatprep.subr.bf16.mxu0 0
        %853 = vmatpush1.bf16.msra.mxu0 0
        %854 = vmatprep.subr.bf16.mxu0 0
        %855 = vmatpush1.bf16.msra.mxu0 0
        %856 = vmatprep.subr.bf16.mxu0 0
        %857 = vmatpush1.bf16.msra.mxu0 0
        %858 = vmatprep.subr.bf16.mxu0 0
        %859 = vmatpush1.bf16.msra.mxu0 0
        %860 = vmatprep.subr.bf16.mxu0 0
        %861 = vmatpush1.bf16.msra.mxu0 0
        %862 = vmatprep.subr.bf16.mxu0 0
        %863 = vmatpush1.bf16.msra.mxu0 0
        %864 = vmatprep.subr.bf16.mxu0 0
        %865 = vmatpush1.bf16.msra.mxu0 0
        %866 = vmatprep.subr.bf16.mxu0 0
        %867 = vmatpush1.bf16.msra.mxu0 0
        %868 = vmatprep.subr.bf16.mxu0 0
        %869 = vmatpush1.bf16.msra.mxu0 0
        %870 = vmatprep.subr.bf16.mxu0 0
        %871 = vmatpush1.bf16.msra.mxu0 0
        %872 = vmatprep.subr.bf16.mxu0 0
        %873 = vmatpush1.bf16.msra.mxu0 0
        %874 = vmatprep.subr.bf16.mxu0 0
        %875 = vmatpush1.bf16.msra.mxu0 0
        %876 = vmatprep.subr.bf16.mxu0 0
        %877 = vmatpush1.bf16.msra.mxu0 0
        %878 = vmatprep.mubr.bf16.mxu0 0
        %879 = vmatmul.mubr.bf16.gmra.mrb[0].mxu0 %v795
        %v880 = vpop.f32.mrb[0].mxu0
        %v881 = vadd.f32 %v556, %v880
        %v882 = vpop.f32.mrb[0].mxu0
        %v883 = vpop.f32.mrb[0].mxu0
        %v884 = vadd.f32 %v561, %v883
        %v885 = vpop.f32.mrb[0].mxu0
        %886 = vmatprep.mubr.bf16.mxu0 0
        %887 = vmatmul.mubr.bf16.gmra.mrb[0].mxu0 %v798
        %v888 = vpop.f32.mrb[0].mxu0
        %v889 = vadd.f32 %v566, %v888
        %v890 = vpop.f32.mrb[0].mxu0
        %v891 = vpop.f32.mrb[0].mxu0
        %v892 = vadd.f32 %v571, %v891
        %v893 = vpop.f32.mrb[0].mxu0
        %894 = vmatprep.mubr.bf16.mxu0 0
        %895 = vmatmul.mubr.bf16.gmra.mrb[0].mxu0 %v801
        %v896 = vpop.f32.mrb[0].mxu0
        %v897 = vadd.f32 %v576, %v896
        %v898 = vpop.f32.mrb[0].mxu0
        %v899 = vpop.f32.mrb[0].mxu0
        %v900 = vadd.f32 %v581, %v899
        %v901 = vpop.f32.mrb[0].mxu0
        %902 = vmatprep.mubr.bf16.mxu0 0
        %903 = vmatmul.mubr.bf16.gmra.mrb[0].mxu0 %v804
        %v904 = vpop.f32.mrb[0].mxu0
        %v905 = vadd.f32 %v586, %v904
        %v906 = vpop.f32.mrb[0].mxu0
        %v907 = vpop.f32.mrb[0].mxu0
        %v908 = vadd.f32 %v591, %v907
        %v909 = vpop.f32.mrb[0].mxu0
        %910 = vmatprep.mubr.bf16.mxu0 0
        %911 = vmatmul.mubr.bf16.gmra.mrb[0].mxu0 %v807
        %v912 = vpop.f32.mrb[0].mxu0
        %v913 = vadd.f32 %v596, %v912
        %v914 = vpop.f32.mrb[0].mxu0
        %v915 = vpop.f32.mrb[0].mxu0
        %v916 = vadd.f32 %v601, %v915
        %v917 = vpop.f32.mrb[0].mxu0
        %918 = vmatprep.mubr.bf16.mxu0 0
        %919 = vmatmul.mubr.bf16.gmra.mrb[0].mxu0 %v810
        %v920 = vpop.f32.mrb[0].mxu0
        %v921 = vadd.f32 %v606, %v920
        %v922 = vpop.f32.mrb[0].mxu0
        %v923 = vpop.f32.mrb[0].mxu0
        %v924 = vadd.f32 %v611, %v923
        %v925 = vpop.f32.mrb[0].mxu0
        %926 = vmatprep.mubr.bf16.mxu0 0
        %927 = vmatmul.mubr.bf16.gmra.mrb[0].mxu0 %v813
        %v928 = vpop.f32.mrb[0].mxu0
        %v929 = vadd.f32 %v616, %v928
        %v930 = vpop.f32.mrb[0].mxu0
        %v931 = vpop.f32.mrb[0].mxu0
        %v932 = vadd.f32 %v621, %v931
        %v933 = vpop.f32.mrb[0].mxu0
        %934 = vmatprep.mubr.bf16.mxu0 0
        %935 = vmatmul.mubr.bf16.gmra.mrb[0].mxu0 %v816
        %v936 = vpop.f32.mrb[0].mxu0
        %v937 = vadd.f32 %v626, %v936
        %v938 = vpop.f32.mrb[0].mxu0
        %v939 = vpop.f32.mrb[0].mxu0
        %v940 = vadd.f32 %v631, %v939
        %v941 = vpop.f32.mrb[0].mxu0
        %942 = vmatprep.mubr.bf16.mxu0 0
        %943 = vmatmul.mubr.bf16.gmra.mrb[0].mxu0 %v819
        %v944 = vpop.f32.mrb[0].mxu0
        %v945 = vadd.f32 %v636, %v944
        %v946 = vpop.f32.mrb[0].mxu0
        %v947 = vpop.f32.mrb[0].mxu0
        %v948 = vadd.f32 %v641, %v947
        %v949 = vpop.f32.mrb[0].mxu0
        %950 = vmatprep.mubr.bf16.mxu0 0
        %951 = vmatmul.mubr.bf16.gmra.mrb[0].mxu0 %v822
        %v952 = vpop.f32.mrb[0].mxu0
        %v953 = vadd.f32 %v646, %v952
        %v954 = vpop.f32.mrb[0].mxu0
        %v955 = vpop.f32.mrb[0].mxu0
        %v956 = vadd.f32 %v651, %v955
        %v957 = vpop.f32.mrb[0].mxu0
        %958 = vmatprep.mubr.bf16.mxu0 0
        %959 = vmatmul.mubr.bf16.gmra.mrb[0].mxu0 %v825
        %v960 = vpop.f32.mrb[0].mxu0
        %v961 = vadd.f32 %v656, %v960
        %v962 = vpop.f32.mrb[0].mxu0
        %v963 = vpop.f32.mrb[0].mxu0
        %v964 = vadd.f32 %v661, %v963
        %v965 = vpop.f32.mrb[0].mxu0
        %966 = vmatprep.mubr.bf16.mxu0 0
        %967 = vmatmul.mubr.bf16.gmra.mrb[0].mxu0 %v828
        %v968 = vpop.f32.mrb[0].mxu0
        %v969 = vadd.f32 %v666, %v968
        %v970 = vpop.f32.mrb[0].mxu0
        %v971 = vpop.f32.mrb[0].mxu0
        %v972 = vadd.f32 %v671, %v971
        %v973 = vpop.f32.mrb[0].mxu0
        %974 = vmatprep.mubr.bf16.mxu0 0
        %975 = vmatmul.mubr.bf16.gmra.mrb[0].mxu0 %v831
        %v976 = vpop.f32.mrb[0].mxu0
        %v977 = vadd.f32 %v676, %v976
        %v978 = vpop.f32.mrb[0].mxu0
        %v979 = vpop.f32.mrb[0].mxu0
        %v980 = vadd.f32 %v681, %v979
        %v981 = vpop.f32.mrb[0].mxu0
        %982 = vmatprep.mubr.bf16.mxu0 0
        %983 = vmatmul.mubr.bf16.gmra.mrb[0].mxu0 %v834
        %v984 = vpop.f32.mrb[0].mxu0
        %v985 = vadd.f32 %v686, %v984
        %v986 = vpop.f32.mrb[0].mxu0
        %v987 = vpop.f32.mrb[0].mxu0
        %v988 = vadd.f32 %v691, %v987
        %v989 = vpop.f32.mrb[0].mxu0
        %990 = vmatprep.mubr.bf16.mxu0 0
        %991 = vmatmul.mubr.bf16.gmra.mrb[0].mxu0 %v837
        %v992 = vpop.f32.mrb[0].mxu0
        %v993 = vadd.f32 %v696, %v992
        %v994 = vpop.f32.mrb[0].mxu0
        %v995 = vpop.f32.mrb[0].mxu0
        %v996 = vadd.f32 %v701, %v995
        %v997 = vpop.f32.mrb[0].mxu0
        %998 = vmatprep.mubr.bf16.mxu0 0
        %999 = vmatmul.mubr.bf16.gmra.mrb[0].mxu0 %v840
        %v1000 = vpop.f32.mrb[0].mxu0
        %v1001 = vadd.f32 %v706, %v1000
        %v1002 = vpop.f32.mrb[0].mxu0
        %v1003 = vpop.f32.mrb[0].mxu0
        %v1004 = vadd.f32 %v711, %v1003
        %v1005 = vpop.f32.mrb[0].mxu0
        %1006 = vdwg.mxu0
        %v1007 = vmul.f32 %v881, 0.5
        %v1008 = vmul.f32 %v884, 0.5
        %v1009 = vmul.f32 %v889, 0.5
        %v1010 = vmul.f32 %v892, 0.5
        %v1011 = vmul.f32 %v897, 0.5
        %v1012 = vmul.f32 %v900, 0.5
        %v1013 = vmul.f32 %v905, 0.5
        %v1014 = vmul.f32 %v908, 0.5
        %v1015 = vmul.f32 %v913, 0.5
        %v1016 = vmul.f32 %v916, 0.5
        %v1017 = vmul.f32 %v921, 0.5
        %v1018 = vmul.f32 %v924, 0.5
        %v1019 = vmul.f32 %v929, 0.5
        %v1020 = vmul.f32 %v932, 0.5
        %v1021 = vmul.f32 %v937, 0.5
        %v1022 = vmul.f32 %v940, 0.5
        %v1023 = vmul.f32 %v945, 0.5
        %v1024 = vmul.f32 %v948, 0.5
        %v1025 = vmul.f32 %v953, 0.5
        %v1026 = vmul.f32 %v956, 0.5
        %v1027 = vmul.f32 %v961, 0.5
        %v1028 = vmul.f32 %v964, 0.5
        %v1029 = vmul.f32 %v969, 0.5
        %v1030 = vmul.f32 %v972, 0.5
        %v1031 = vmul.f32 %v977, 0.5
        %v1032 = vmul.f32 %v980, 0.5
        %v1033 = vmul.f32 %v985, 0.5
        %v1034 = vmul.f32 %v988, 0.5
        %v1035 = vmul.f32 %v993, 0.5
        %v1036 = vmul.f32 %v996, 0.5
        %v1037 = vmul.f32 %v1001, 0.5
        %v1038 = vmul.f32 %v1004, 0.5
        %v1039 = vmul.f32 %v881, 0.70710677
        %v1040 = vmul.f32 %v884, 0.70710677
        %v1041 = vmul.f32 %v889, 0.70710677
        %v1042 = vmul.f32 %v892, 0.70710677
        %v1043 = vmul.f32 %v897, 0.70710677
        %v1044 = vmul.f32 %v900, 0.70710677
        %v1045 = vmul.f32 %v905, 0.70710677
        %v1046 = vmul.f32 %v908, 0.70710677
        %v1047 = vmul.f32 %v913, 0.70710677
        %v1048 = vmul.f32 %v916, 0.70710677
        %v1049 = vmul.f32 %v921, 0.70710677
        %v1050 = vmul.f32 %v924, 0.70710677
        %v1051 = vmul.f32 %v929, 0.70710677
        %v1052 = vmul.f32 %v932, 0.70710677
        %v1053 = vmul.f32 %v937, 0.70710677
        %v1054 = vmul.f32 %v940, 0.70710677
        %v1055 = vmul.f32 %v945, 0.70710677
        %v1056 = vmul.f32 %v948, 0.70710677
        %v1057 = vmul.f32 %v953, 0.70710677
        %v1058 = vmul.f32 %v956, 0.70710677
        %v1059 = vmul.f32 %v961, 0.70710677
        %v1060 = vmul.f32 %v964, 0.70710677
        %v1061 = vmul.f32 %v969, 0.70710677
        %v1062 = vmul.f32 %v972, 0.70710677
        %v1063 = vmul.f32 %v977, 0.70710677
        %v1064 = vmul.f32 %v980, 0.70710677
        %v1065 = vmul.f32 %v985, 0.70710677
        %v1066 = vmul.f32 %v988, 0.70710677
        %v1067 = vmul.f32 %v993, 0.70710677
        %v1068 = vmul.f32 %v996, 0.70710677
        %v1069 = vmul.f32 %v1001, 0.70710677
        %v1070 = vmul.f32 %v1004, 0.70710677
        %v1071 = verf.f32.pop %v1039
        %v1072 = verf.f32.pop %v1040
        %v1073 = verf.f32.pop %v1041
        %v1074 = verf.f32.pop %v1042
        %v1075 = verf.f32.pop %v1043
        %v1076 = verf.f32.pop %v1044
        %v1077 = verf.f32.pop %v1045
        %v1078 = verf.f32.pop %v1046
        %v1079 = verf.f32.pop %v1047
        %v1080 = verf.f32.pop %v1048
        %v1081 = verf.f32.pop %v1049
        %v1082 = verf.f32.pop %v1050
        %v1083 = verf.f32.pop %v1051
        %v1084 = verf.f32.pop %v1052
        %v1085 = verf.f32.pop %v1053
        %v1086 = verf.f32.pop %v1054
        %v1087 = verf.f32.pop %v1055
        %v1088 = verf.f32.pop %v1056
        %v1089 = verf.f32.pop %v1057
        %v1090 = verf.f32.pop %v1058
        %v1091 = verf.f32.pop %v1059
        %v1092 = verf.f32.pop %v1060
        %v1093 = verf.f32.pop %v1061
        %v1094 = verf.f32.pop %v1062
        %v1095 = verf.f32.pop %v1063
        %v1096 = verf.f32.pop %v1064
        %v1097 = verf.f32.pop %v1065
        %v1098 = verf.f32.pop %v1066
        %v1099 = verf.f32.pop %v1067
        %v1100 = verf.f32.pop %v1068
        %v1101 = verf.f32.pop %v1069
        %v1102 = verf.f32.pop %v1070
        %v1103 = vadd.f32 %v1071, 1.0
        %v1104 = vadd.f32 %v1072, 1.0
        %v1105 = vadd.f32 %v1073, 1.0
        %v1106 = vadd.f32 %v1074, 1.0
        %v1107 = vadd.f32 %v1075, 1.0
        %v1108 = vadd.f32 %v1076, 1.0
        %v1109 = vadd.f32 %v1077, 1.0
        %v1110 = vadd.f32 %v1078, 1.0
        %v1111 = vadd.f32 %v1079, 1.0
        %v1112 = vadd.f32 %v1080, 1.0
        %v1113 = vadd.f32 %v1081, 1.0
        %v1114 = vadd.f32 %v1082, 1.0
        %v1115 = vadd.f32 %v1083, 1.0
        %v1116 = vadd.f32 %v1084, 1.0
        %v1117 = vadd.f32 %v1085, 1.0
        %v1118 = vadd.f32 %v1086, 1.0
        %v1119 = vadd.f32 %v1087, 1.0
        %v1120 = vadd.f32 %v1088, 1.0
        %v1121 = vadd.f32 %v1089, 1.0
        %v1122 = vadd.f32 %v1090, 1.0
        %v1123 = vadd.f32 %v1091, 1.0
        %v1124 = vadd.f32 %v1092, 1.0
        %v1125 = vadd.f32 %v1093, 1.0
        %v1126 = vadd.f32 %v1094, 1.0
        %v1127 = vadd.f32 %v1095, 1.0
        %v1128 = vadd.f32 %v1096, 1.0
        %v1129 = vadd.f32 %v1097, 1.0
        %v1130 = vadd.f32 %v1098, 1.0
        %v1131 = vadd.f32 %v1099, 1.0
        %v1132 = vadd.f32 %v1100, 1.0
        %v1133 = vadd.f32 %v1101, 1.0
        %v1134 = vadd.f32 %v1102, 1.0
        %v1135 = vmul.f32 %v1007, %v1103
        %v1136 = vmul.f32 %v1008, %v1104
        %v1137 = vmul.f32 %v1009, %v1105
        %v1138 = vmul.f32 %v1010, %v1106
        %v1139 = vmul.f32 %v1011, %v1107
        %v1140 = vmul.f32 %v1012, %v1108
        %v1141 = vmul.f32 %v1013, %v1109
        %v1142 = vmul.f32 %v1014, %v1110
        %v1143 = vmul.f32 %v1015, %v1111
        %v1144 = vmul.f32 %v1016, %v1112
        %v1145 = vmul.f32 %v1017, %v1113
        %v1146 = vmul.f32 %v1018, %v1114
        %v1147 = vmul.f32 %v1019, %v1115
        %v1148 = vmul.f32 %v1020, %v1116
        %v1149 = vmul.f32 %v1021, %v1117
        %v1150 = vmul.f32 %v1022, %v1118
        %v1151 = vmul.f32 %v1023, %v1119
        %v1152 = vmul.f32 %v1024, %v1120
        %v1153 = vmul.f32 %v1025, %v1121
        %v1154 = vmul.f32 %v1026, %v1122
        %v1155 = vmul.f32 %v1027, %v1123
        %v1156 = vmul.f32 %v1028, %v1124
        %v1157 = vmul.f32 %v1029, %v1125
        %v1158 = vmul.f32 %v1030, %v1126
        %v1159 = vmul.f32 %v1031, %v1127
        %v1160 = vmul.f32 %v1032, %v1128
        %v1161 = vmul.f32 %v1033, %v1129
        %v1162 = vmul.f32 %v1034, %v1130
        %v1163 = vmul.f32 %v1035, %v1131
        %v1164 = vmul.f32 %v1036, %v1132
        %v1165 = vmul.f32 %v1037, %v1133
        %v1166 = vmul.f32 %v1038, %v1134
        %v1167 = vpack.c.bf16 %v1136, %v1135
        %v1168 = vpack.c.bf16 %v1138, %v1137
        %v1169 = vpack.c.bf16 %v1140, %v1139
        %v1170 = vpack.c.bf16 %v1142, %v1141
        %v1171 = vpack.c.bf16 %v1144, %v1143
        %v1172 = vpack.c.bf16 %v1146, %v1145
        %v1173 = vpack.c.bf16 %v1148, %v1147
        %v1174 = vpack.c.bf16 %v1150, %v1149
        %v1175 = vpack.c.bf16 %v1152, %v1151
        %v1176 = vpack.c.bf16 %v1154, %v1153
        %v1177 = vpack.c.bf16 %v1156, %v1155
        %v1178 = vpack.c.bf16 %v1158, %v1157
        %v1179 = vpack.c.bf16 %v1160, %v1159
        %v1180 = vpack.c.bf16 %v1162, %v1161
        %v1181 = vpack.c.bf16 %v1164, %v1163
        %v1182 = vpack.c.bf16 %v1166, %v1165
        %1184 = vset.pattern.permute.xlu0 0
        %1185 = vperm.xlu0 %1184, %v551
        %v1186 = vpop.permute.xlu0 %1185
        %v1189 = vunpack.c.l.b16 %v518
        %v1190 = vunpack.c.h.b16 %v518
        %v1191 = vpack.c.b16 %v1189, %v1189
        %v1192 = vpack.c.b16 %v1190, %v1190
        %1195 = vmatprep.subr.bf16.mxu0 0
        %1196 = vmatpush1.bf16.msra.mxu0 %v1167
        %1197 = vmatprep.subr.bf16.mxu0 0
        %1198 = vmatpush1.bf16.msra.mxu0 %v1168
        %1199 = vmatprep.subr.bf16.mxu0 0
        %1200 = vmatpush1.bf16.msra.mxu0 %v1169
        %1201 = vmatprep.subr.bf16.mxu0 0
        %1202 = vmatpush1.bf16.msra.mxu0 %v1170
        %1203 = vmatprep.subr.bf16.mxu0 0
        %1204 = vmatpush1.bf16.msra.mxu0 %v1171
        %1205 = vmatprep.subr.bf16.mxu0 0
        %1206 = vmatpush1.bf16.msra.mxu0 %v1172
        %1207 = vmatprep.subr.bf16.mxu0 0
        %1208 = vmatpush1.bf16.msra.mxu0 %v1173
        %1209 = vmatprep.subr.bf16.mxu0 0
        %1210 = vmatpush1.bf16.msra.mxu0 %v1174
        %1211 = vmatprep.subr.bf16.mxu0 0
        %1212 = vmatpush1.bf16.msra.mxu0 %v1175
        %1213 = vmatprep.subr.bf16.mxu0 0
        %1214 = vmatpush1.bf16.msra.mxu0 %v1176
        %1215 = vmatprep.subr.bf16.mxu0 0
        %1216 = vmatpush1.bf16.msra.mxu0 %v1177
        %1217 = vmatprep.subr.bf16.mxu0 0
        %1218 = vmatpush1.bf16.msra.mxu0 %v1178
        %1219 = vmatprep.subr.bf16.mxu0 0
        %1220 = vmatpush1.bf16.msra.mxu0 %v1179
        %1221 = vmatprep.subr.bf16.mxu0 0
        %1222 = vmatpush1.bf16.msra.mxu0 %v1180
        %1223 = vmatprep.subr.bf16.mxu0 0
        %1224 = vmatpush1.bf16.msra.mxu0 %v1181
        %1225 = vmatprep.subr.bf16.mxu0 0
        %1226 = vmatpush1.bf16.msra.mxu0 %v1182
        %1227 = vmatprep.mubr.bf16.mxu0 %v1192
        %1228 = vmatmul.mubr.bf16.gmra.mrb[0].mxu0 %v1191
        %v1229 = vpop.f32.mrb[0].mxu0
        %v1230 = vadd.f32 %v1186, %v1229
        %v1231 = vpop.f32.mrb[0].mxu0
        %v1232 = vpop.f32.mrb[0].mxu0
        %v1233 = vpop.f32.mrb[0].mxu0
        %1234 = vdwg.mxu0
        %v1235 = vadd.f32 %v443, %v1230
        %v1236 = vpack.c.bf16 %v485, %v485
        %v1238 = vsel %vm842, %v1236, 0
        %1240 = vmatprep.subr.bf16.mxu0 0
        %1241 = vmatpush1.bf16.msra.mxu0 %v1238
        %1242 = vmatprep.subr.bf16.mxu0 0
        %1243 = vmatpush1.bf16.msra.mxu0 0
        %1244 = vmatprep.subr.bf16.mxu0 0
        %1245 = vmatpush1.bf16.msra.mxu0 0
        %1246 = vmatprep.subr.bf16.mxu0 0
        %1247 = vmatpush1.bf16.msra.mxu0 0
        %1248 = vmatprep.subr.bf16.mxu0 0
        %1249 = vmatpush1.bf16.msra.mxu0 0
        %1250 = vmatprep.subr.bf16.mxu0 0
        %1251 = vmatpush1.bf16.msra.mxu0 0
        %1252 = vmatprep.subr.bf16.mxu0 0
        %1253 = vmatpush1.bf16.msra.mxu0 0
        %1254 = vmatprep.subr.bf16.mxu0 0
        %1255 = vmatpush1.bf16.msra.mxu0 0
        %1256 = vmatprep.subr.bf16.mxu0 0
        %1257 = vmatpush1.bf16.msra.mxu0 0
        %1258 = vmatprep.subr.bf16.mxu0 0
        %1259 = vmatpush1.bf16.msra.mxu0 0
        %1260 = vmatprep.subr.bf16.mxu0 0
        %1261 = vmatpush1.bf16.msra.mxu0 0
        %1262 = vmatprep.subr.bf16.mxu0 0
        %1263 = vmatpush1.bf16.msra.mxu0 0
        %1264 = vmatprep.subr.bf16.mxu0 0
        %1265 = vmatpush1.bf16.msra.mxu0 0
        %1266 = vmatprep.subr.bf16.mxu0 0
        %1267 = vmatpush1.bf16.msra.mxu0 0
        %1268 = vmatprep.subr.bf16.mxu0 0
        %1269 = vmatpush1.bf16.msra.mxu0 0
        %1270 = vmatprep.subr.bf16.mxu0 0
        %1271 = vmatpush1.bf16.msra.mxu0 0
        %1272 = vmatprep.mubr.bf16.mxu0 0
        %1273 = vmatmul.mubr.bf16.gmra.mrb[0].mxu0 %v795
        %v1274 = vpop.f32.mrb[0].mxu0
        %v1275 = vadd.f32 %v556, %v1274
        %v1276 = vpop.f32.mrb[0].mxu0
        %v1277 = vpop.f32.mrb[0].mxu0
        %v1278 = vadd.f32 %v561, %v1277
        %v1279 = vpop.f32.mrb[0].mxu0
        %1280 = vmatprep.mubr.bf16.mxu0 0
        %1281 = vmatmul.mubr.bf16.gmra.mrb[0].mxu0 %v798
        %v1282 = vpop.f32.mrb[0].mxu0
        %v1283 = vadd.f32 %v566, %v1282
        %v1284 = vpop.f32.mrb[0].mxu0
        %v1285 = vpop.f32.mrb[0].mxu0
        %v1286 = vadd.f32 %v571, %v1285
        %v1287 = vpop.f32.mrb[0].mxu0
        %1288 = vmatprep.mubr.bf16.mxu0 0
        %1289 = vmatmul.mubr.bf16.gmra.mrb[0].mxu0 %v801
        %v1290 = vpop.f32.mrb[0].mxu0
        %v1291 = vadd.f32 %v576, %v1290
        %v1292 = vpop.f32.mrb[0].mxu0
        %v1293 = vpop.f32.mrb[0].mxu0
        %v1294 = vadd.f32 %v581, %v1293
        %v1295 = vpop.f32.mrb[0].mxu0
        %1296 = vmatprep.mubr.bf16.mxu0 0
        %1297 = vmatmul.mubr.bf16.gmra.mrb[0].mxu0 %v804
        %v1298 = vpop.f32.mrb[0].mxu0
        %v1299 = vadd.f32 %v586, %v1298
        %v1300 = vpop.f32.mrb[0].mxu0
        %v1301 = vpop.f32.mrb[0].mxu0
        %v1302 = vadd.f32 %v591, %v1301
        %v1303 = vpop.f32.mrb[0].mxu0
        %1304 = vmatprep.mubr.bf16.mxu0 0
        %1305 = vmatmul.mubr.bf16.gmra.mrb[0].mxu0 %v807
        %v1306 = vpop.f32.mrb[0].mxu0
        %v1307 = vadd.f32 %v596, %v1306
        %v1308 = vpop.f32.mrb[0].mxu0
        %v1309 = vpop.f32.mrb[0].mxu0
        %v1310 = vadd.f32 %v601, %v1309
        %v1311 = vpop.f32.mrb[0].mxu0
        %1312 = vmatprep.mubr.bf16.mxu0 0
        %1313 = vmatmul.mubr.bf16.gmra.mrb[0].mxu0 %v810
        %v1314 = vpop.f32.mrb[0].mxu0
        %v1315 = vadd.f32 %v606, %v1314
        %v1316 = vpop.f32.mrb[0].mxu0
        %v1317 = vpop.f32.mrb[0].mxu0
        %v1318 = vadd.f32 %v611, %v1317
        %v1319 = vpop.f32.mrb[0].mxu0
        %1320 = vmatprep.mubr.bf16.mxu0 0
        %1321 = vmatmul.mubr.bf16.gmra.mrb[0].mxu0 %v813
        %v1322 = vpop.f32.mrb[0].mxu0
        %v1323 = vadd.f32 %v616, %v1322
        %v1324 = vpop.f32.mrb[0].mxu0
        %v1325 = vpop.f32.mrb[0].mxu0
        %v1326 = vadd.f32 %v621, %v1325
        %v1327 = vpop.f32.mrb[0].mxu0
        %1328 = vmatprep.mubr.bf16.mxu0 0
        %1329 = vmatmul.mubr.bf16.gmra.mrb[0].mxu0 %v816
        %v1330 = vpop.f32.mrb[0].mxu0
        %v1331 = vadd.f32 %v626, %v1330
        %v1332 = vpop.f32.mrb[0].mxu0
        %v1333 = vpop.f32.mrb[0].mxu0
        %v1334 = vadd.f32 %v631, %v1333
        %v1335 = vpop.f32.mrb[0].mxu0
        %1336 = vmatprep.mubr.bf16.mxu0 0
        %1337 = vmatmul.mubr.bf16.gmra.mrb[0].mxu0 %v819
        %v1338 = vpop.f32.mrb[0].mxu0
        %v1339 = vadd.f32 %v636, %v1338
        %v1340 = vpop.f32.mrb[0].mxu0
        %v1341 = vpop.f32.mrb[0].mxu0
        %v1342 = vadd.f32 %v641, %v1341
        %v1343 = vpop.f32.mrb[0].mxu0
        %1344 = vmatprep.mubr.bf16.mxu0 0
        %1345 = vmatmul.mubr.bf16.gmra.mrb[0].mxu0 %v822
        %v1346 = vpop.f32.mrb[0].mxu0
        %v1347 = vadd.f32 %v646, %v1346
        %v1348 = vpop.f32.mrb[0].mxu0
        %v1349 = vpop.f32.mrb[0].mxu0
        %v1350 = vadd.f32 %v651, %v1349
        %v1351 = vpop.f32.mrb[0].mxu0
        %1352 = vmatprep.mubr.bf16.mxu0 0
        %1353 = vmatmul.mubr.bf16.gmra.mrb[0].mxu0 %v825
        %v1354 = vpop.f32.mrb[0].mxu0
        %v1355 = vadd.f32 %v656, %v1354
        %v1356 = vpop.f32.mrb[0].mxu0
        %v1357 = vpop.f32.mrb[0].mxu0
        %v1358 = vadd.f32 %v661, %v1357
        %v1359 = vpop.f32.mrb[0].mxu0
        %1360 = vmatprep.mubr.bf16.mxu0 0
        %1361 = vmatmul.mubr.bf16.gmra.mrb[0].mxu0 %v828
        %v1362 = vpop.f32.mrb[0].mxu0
        %v1363 = vadd.f32 %v666, %v1362
        %v1364 = vpop.f32.mrb[0].mxu0
        %v1365 = vpop.f32.mrb[0].mxu0
        %v1366 = vadd.f32 %v671, %v1365
        %v1367 = vpop.f32.mrb[0].mxu0
        %1368 = vmatprep.mubr.bf16.mxu0 0
        %1369 = vmatmul.mubr.bf16.gmra.mrb[0].mxu0 %v831
        %v1370 = vpop.f32.mrb[0].mxu0
        %v1371 = vadd.f32 %v676, %v1370
        %v1372 = vpop.f32.mrb[0].mxu0
        %v1373 = vpop.f32.mrb[0].mxu0
        %v1374 = vadd.f32 %v681, %v1373
        %v1375 = vpop.f32.mrb[0].mxu0
        %1376 = vmatprep.mubr.bf16.mxu0 0
        %1377 = vmatmul.mubr.bf16.gmra.mrb[0].mxu0 %v834
        %v1378 = vpop.f32.mrb[0].mxu0
        %v1379 = vadd.f32 %v686, %v1378
        %v1380 = vpop.f32.mrb[0].mxu0
        %v1381 = vpop.f32.mrb[0].mxu0
        %v1382 = vadd.f32 %v691, %v1381
        %v1383 = vpop.f32.mrb[0].mxu0
        %1384 = vmatprep.mubr.bf16.mxu0 0
        %1385 = vmatmul.mubr.bf16.gmra.mrb[0].mxu0 %v837
        %v1386 = vpop.f32.mrb[0].mxu0
        %v1387 = vadd.f32 %v696, %v1386
        %v1388 = vpop.f32.mrb[0].mxu0
        %v1389 = vpop.f32.mrb[0].mxu0
        %v1390 = vadd.f32 %v701, %v1389
        %v1391 = vpop.f32.mrb[0].mxu0
        %1392 = vmatprep.mubr.bf16.mxu0 0
        %1393 = vmatmul.mubr.bf16.gmra.mrb[0].mxu0 %v840
        %v1394 = vpop.f32.mrb[0].mxu0
        %v1395 = vadd.f32 %v706, %v1394
        %v1396 = vpop.f32.mrb[0].mxu0
        %v1397 = vpop.f32.mrb[0].mxu0
        %v1398 = vadd.f32 %v711, %v1397
        %v1399 = vpop.f32.mrb[0].mxu0
        %1400 = vdwg.mxu0
        %v1401 = vmul.f32 %v1275, 0.5
        %v1402 = vmul.f32 %v1278, 0.5
        %v1403 = vmul.f32 %v1283, 0.5
        %v1404 = vmul.f32 %v1286, 0.5
        %v1405 = vmul.f32 %v1291, 0.5
        %v1406 = vmul.f32 %v1294, 0.5
        %v1407 = vmul.f32 %v1299, 0.5
        %v1408 = vmul.f32 %v1302, 0.5
        %v1409 = vmul.f32 %v1307, 0.5
        %v1410 = vmul.f32 %v1310, 0.5
        %v1411 = vmul.f32 %v1315, 0.5
        %v1412 = vmul.f32 %v1318, 0.5
        %v1413 = vmul.f32 %v1323, 0.5
        %v1414 = vmul.f32 %v1326, 0.5
        %v1415 = vmul.f32 %v1331, 0.5
        %v1416 = vmul.f32 %v1334, 0.5
        %v1417 = vmul.f32 %v1339, 0.5
        %v1418 = vmul.f32 %v1342, 0.5
        %v1419 = vmul.f32 %v1347, 0.5
        %v1420 = vmul.f32 %v1350, 0.5
        %v1421 = vmul.f32 %v1355, 0.5
        %v1422 = vmul.f32 %v1358, 0.5
        %v1423 = vmul.f32 %v1363, 0.5
        %v1424 = vmul.f32 %v1366, 0.5
        %v1425 = vmul.f32 %v1371, 0.5
        %v1426 = vmul.f32 %v1374, 0.5
        %v1427 = vmul.f32 %v1379, 0.5
        %v1428 = vmul.f32 %v1382, 0.5
        %v1429 = vmul.f32 %v1387, 0.5
        %v1430 = vmul.f32 %v1390, 0.5
        %v1431 = vmul.f32 %v1395, 0.5
        %v1432 = vmul.f32 %v1398, 0.5
        %v1433 = vmul.f32 %v1275, 0.70710677
        %v1434 = vmul.f32 %v1278, 0.70710677
        %v1435 = vmul.f32 %v1283, 0.70710677
        %v1436 = vmul.f32 %v1286, 0.70710677
        %v1437 = vmul.f32 %v1291, 0.70710677
        %v1438 = vmul.f32 %v1294, 0.70710677
        %v1439 = vmul.f32 %v1299, 0.70710677
        %v1440 = vmul.f32 %v1302, 0.70710677
        %v1441 = vmul.f32 %v1307, 0.70710677
        %v1442 = vmul.f32 %v1310, 0.70710677
        %v1443 = vmul.f32 %v1315, 0.70710677
        %v1444 = vmul.f32 %v1318, 0.70710677
        %v1445 = vmul.f32 %v1323, 0.70710677
        %v1446 = vmul.f32 %v1326, 0.70710677
        %v1447 = vmul.f32 %v1331, 0.70710677
        %v1448 = vmul.f32 %v1334, 0.70710677
        %v1449 = vmul.f32 %v1339, 0.70710677
        %v1450 = vmul.f32 %v1342, 0.70710677
        %v1451 = vmul.f32 %v1347, 0.70710677
        %v1452 = vmul.f32 %v1350, 0.70710677
        %v1453 = vmul.f32 %v1355, 0.70710677
        %v1454 = vmul.f32 %v1358, 0.70710677
        %v1455 = vmul.f32 %v1363, 0.70710677
        %v1456 = vmul.f32 %v1366, 0.70710677
        %v1457 = vmul.f32 %v1371, 0.70710677
        %v1458 = vmul.f32 %v1374, 0.70710677
        %v1459 = vmul.f32 %v1379, 0.70710677
        %v1460 = vmul.f32 %v1382, 0.70710677
        %v1461 = vmul.f32 %v1387, 0.70710677
        %v1462 = vmul.f32 %v1390, 0.70710677
        %v1463 = vmul.f32 %v1395, 0.70710677
        %v1464 = vmul.f32 %v1398, 0.70710677
        %v1465 = verf.f32.pop %v1433
        %v1466 = verf.f32.pop %v1434
        %v1467 = verf.f32.pop %v1435
        %v1468 = verf.f32.pop %v1436
        %v1469 = verf.f32.pop %v1437
        %v1470 = verf.f32.pop %v1438
        %v1471 = verf.f32.pop %v1439
        %v1472 = verf.f32.pop %v1440
        %v1473 = verf.f32.pop %v1441
        %v1474 = verf.f32.pop %v1442
        %v1475 = verf.f32.pop %v1443
        %v1476 = verf.f32.pop %v1444
        %v1477 = verf.f32.pop %v1445
        %v1478 = verf.f32.pop %v1446
        %v1479 = verf.f32.pop %v1447
        %v1480 = verf.f32.pop %v1448
        %v1481 = verf.f32.pop %v1449
        %v1482 = verf.f32.pop %v1450
        %v1483 = verf.f32.pop %v1451
        %v1484 = verf.f32.pop %v1452
        %v1485 = verf.f32.pop %v1453
        %v1486 = verf.f32.pop %v1454
        %v1487 = verf.f32.pop %v1455
        %v1488 = verf.f32.pop %v1456
        %v1489 = verf.f32.pop %v1457
        %v1490 = verf.f32.pop %v1458
        %v1491 = verf.f32.pop %v1459
        %v1492 = verf.f32.pop %v1460
        %v1493 = verf.f32.pop %v1461
        %v1494 = verf.f32.pop %v1462
        %v1495 = verf.f32.pop %v1463
        %v1496 = verf.f32.pop %v1464
        %v1497 = vadd.f32 %v1465, 1.0
        %v1498 = vadd.f32 %v1466, 1.0
        %v1499 = vadd.f32 %v1467, 1.0
        %v1500 = vadd.f32 %v1468, 1.0
        %v1501 = vadd.f32 %v1469, 1.0
        %v1502 = vadd.f32 %v1470, 1.0
        %v1503 = vadd.f32 %v1471, 1.0
        %v1504 = vadd.f32 %v1472, 1.0
        %v1505 = vadd.f32 %v1473, 1.0
        %v1506 = vadd.f32 %v1474, 1.0
        %v1507 = vadd.f32 %v1475, 1.0
        %v1508 = vadd.f32 %v1476, 1.0
        %v1509 = vadd.f32 %v1477, 1.0
        %v1510 = vadd.f32 %v1478, 1.0
        %v1511 = vadd.f32 %v1479, 1.0
        %v1512 = vadd.f32 %v1480, 1.0
        %v1513 = vadd.f32 %v1481, 1.0
        %v1514 = vadd.f32 %v1482, 1.0
        %v1515 = vadd.f32 %v1483, 1.0
        %v1516 = vadd.f32 %v1484, 1.0
        %v1517 = vadd.f32 %v1485, 1.0
        %v1518 = vadd.f32 %v1486, 1.0
        %v1519 = vadd.f32 %v1487, 1.0
        %v1520 = vadd.f32 %v1488, 1.0
        %v1521 = vadd.f32 %v1489, 1.0
        %v1522 = vadd.f32 %v1490, 1.0
        %v1523 = vadd.f32 %v1491, 1.0
        %v1524 = vadd.f32 %v1492, 1.0
        %v1525 = vadd.f32 %v1493, 1.0
        %v1526 = vadd.f32 %v1494, 1.0
        %v1527 = vadd.f32 %v1495, 1.0
        %v1528 = vadd.f32 %v1496, 1.0
        %v1529 = vmul.f32 %v1401, %v1497
        %v1530 = vmul.f32 %v1402, %v1498
        %v1531 = vmul.f32 %v1403, %v1499
        %v1532 = vmul.f32 %v1404, %v1500
        %v1533 = vmul.f32 %v1405, %v1501
        %v1534 = vmul.f32 %v1406, %v1502
        %v1535 = vmul.f32 %v1407, %v1503
        %v1536 = vmul.f32 %v1408, %v1504
        %v1537 = vmul.f32 %v1409, %v1505
        %v1538 = vmul.f32 %v1410, %v1506
        %v1539 = vmul.f32 %v1411, %v1507
        %v1540 = vmul.f32 %v1412, %v1508
        %v1541 = vmul.f32 %v1413, %v1509
        %v1542 = vmul.f32 %v1414, %v1510
        %v1543 = vmul.f32 %v1415, %v1511
        %v1544 = vmul.f32 %v1416, %v1512
        %v1545 = vmul.f32 %v1417, %v1513
        %v1546 = vmul.f32 %v1418, %v1514
        %v1547 = vmul.f32 %v1419, %v1515
        %v1548 = vmul.f32 %v1420, %v1516
        %v1549 = vmul.f32 %v1421, %v1517
        %v1550 = vmul.f32 %v1422, %v1518
        %v1551 = vmul.f32 %v1423, %v1519
        %v1552 = vmul.f32 %v1424, %v1520
        %v1553 = vmul.f32 %v1425, %v1521
        %v1554 = vmul.f32 %v1426, %v1522
        %v1555 = vmul.f32 %v1427, %v1523
        %v1556 = vmul.f32 %v1428, %v1524
        %v1557 = vmul.f32 %v1429, %v1525
        %v1558 = vmul.f32 %v1430, %v1526
        %v1559 = vmul.f32 %v1431, %v1527
        %v1560 = vmul.f32 %v1432, %v1528
        %v1561 = vpack.c.bf16 %v1530, %v1529
        %v1562 = vpack.c.bf16 %v1532, %v1531
        %v1563 = vpack.c.bf16 %v1534, %v1533
        %v1564 = vpack.c.bf16 %v1536, %v1535
        %v1565 = vpack.c.bf16 %v1538, %v1537
        %v1566 = vpack.c.bf16 %v1540, %v1539
        %v1567 = vpack.c.bf16 %v1542, %v1541
        %v1568 = vpack.c.bf16 %v1544, %v1543
        %v1569 = vpack.c.bf16 %v1546, %v1545
        %v1570 = vpack.c.bf16 %v1548, %v1547
        %v1571 = vpack.c.bf16 %v1550, %v1549
        %v1572 = vpack.c.bf16 %v1552, %v1551
        %v1573 = vpack.c.bf16 %v1554, %v1553
        %v1574 = vpack.c.bf16 %v1556, %v1555
        %v1575 = vpack.c.bf16 %v1558, %v1557
        %v1576 = vpack.c.bf16 %v1560, %v1559
        %1577 = vmatprep.subr.bf16.mxu0 0
        %1578 = vmatpush1.bf16.msra.mxu0 %v1561
        %1579 = vmatprep.subr.bf16.mxu0 0
        %1580 = vmatpush1.bf16.msra.mxu0 %v1562
        %1581 = vmatprep.subr.bf16.mxu0 0
        %1582 = vmatpush1.bf16.msra.mxu0 %v1563
        %1583 = vmatprep.subr.bf16.mxu0 0
        %1584 = vmatpush1.bf16.msra.mxu0 %v1564
        %1585 = vmatprep.subr.bf16.mxu0 0
        %1586 = vmatpush1.bf16.msra.mxu0 %v1565
        %1587 = vmatprep.subr.bf16.mxu0 0
        %1588 = vmatpush1.bf16.msra.mxu0 %v1566
        %1589 = vmatprep.subr.bf16.mxu0 0
        %1590 = vmatpush1.bf16.msra.mxu0 %v1567
        %1591 = vmatprep.subr.bf16.mxu0 0
        %1592 = vmatpush1.bf16.msra.mxu0 %v1568
        %1593 = vmatprep.subr.bf16.mxu0 0
        %1594 = vmatpush1.bf16.msra.mxu0 %v1569
        %1595 = vmatprep.subr.bf16.mxu0 0
        %1596 = vmatpush1.bf16.msra.mxu0 %v1570
        %1597 = vmatprep.subr.bf16.mxu0 0
        %1598 = vmatpush1.bf16.msra.mxu0 %v1571
        %1599 = vmatprep.subr.bf16.mxu0 0
        %1600 = vmatpush1.bf16.msra.mxu0 %v1572
        %1601 = vmatprep.subr.bf16.mxu0 0
        %1602 = vmatpush1.bf16.msra.mxu0 %v1573
        %1603 = vmatprep.subr.bf16.mxu0 0
        %1604 = vmatpush1.bf16.msra.mxu0 %v1574
        %1605 = vmatprep.subr.bf16.mxu0 0
        %1606 = vmatpush1.bf16.msra.mxu0 %v1575
        %1607 = vmatprep.subr.bf16.mxu0 0
        %1608 = vmatpush1.bf16.msra.mxu0 %v1576
        %1609 = vmatprep.mubr.bf16.mxu0 %v1192
        %1610 = vmatmul.mubr.bf16.gmra.mrb[0].mxu0 %v1191
        %v1611 = vpop.f32.mrb[0].mxu0
        %v1612 = vadd.f32 %v1186, %v1611
        %v1613 = vpop.f32.mrb[0].mxu0
        %v1614 = vpop.f32.mrb[0].mxu0
        %v1615 = vpop.f32.mrb[0].mxu0
        %1616 = vdwg.mxu0
        %v1617 = vadd.f32 %v444, %v1612
        %v1618 = vld [vmem:[%s7] sm:$0x1]
        %v1619 = vld [vmem:[%s8] sm:$0x1]
        %1620 = vadd.xlane.f32.xlu0 %v1235
        %v1621 = vpop.xlane.xlu0 %1620
        %1622 = vadd.xlane.f32.xlu0 %v1617
        %v1623 = vpop.xlane.xlu0 %1622
        %v1624 = vmul.f32 %v1621, %v451
        %v1625 = vmul.f32 %v1623, %v451
        %v1626 = vsub.f32 %v1235, %v1624
        %v1627 = vsub.f32 %v1617, %v1625
        %v1628 = vmul.f32 %v1626, %v1626
        %v1629 = vmul.f32 %v1627, %v1627
        %1630 = vadd.xlane.f32.xlu0 %v1628
        %v1631 = vpop.xlane.xlu0 %1630
        %1632 = vadd.xlane.f32.xlu0 %v1629
        %v1633 = vpop.xlane.xlu0 %1632
        %v1634 = vmul.f32 %v1631, %v451
        %v1635 = vmul.f32 %v1633, %v451
        %v1636 = vadd.f32 %v1634, 1e-05
        %v1637 = vadd.f32 %v1635, 1e-05
        %v1638 = vrsqrt.pop %v1636
        %v1639 = vrsqrt.pop %v1637
        %v1640 = vmul.f32 %v1626, %v1638
        %v1641 = vmul.f32 %v1627, %v1639
        %v1643 = vlaneseq
        %v1644 = vshrl.u32 %v1643, 7
        %v1645 = vsub.s32 0, %v1644
        %v1646 = vrot.slane %v1618, %v1645
        %v1648 = vmul.f32 %v1640, %v1646
        %v1649 = vmul.f32 %v1641, %v1646
        %v1651 = vlaneseq
        %v1652 = vshrl.u32 %v1651, 7
        %v1653 = vsub.s32 0, %v1652
        %v1654 = vrot.slane %v1619, %v1653
        %v1656 = vadd.f32 %v1648, %v1654
        %v1657 = vadd.f32 %v1649, %v1654
        %v1658 = vpack.c.bf16 %v1657, %v1656
        %v1659 = vld [vmem:[%s9] sm:$0xff]
        %v1660 = vld [vmem:[%s9 + $0x8] sm:$0xff]
        %v1661 = vld [vmem:[%s9 + $0x10] sm:$0xff]
        %v1662 = vld [vmem:[%s9 + $0x18] sm:$0xff]
        %v1663 = vld [vmem:[%s9 + $0x20] sm:$0xff]
        %v1664 = vld [vmem:[%s9 + $0x28] sm:$0xff]
        %v1665 = vld [vmem:[%s9 + $0x30] sm:$0xff]
        %v1666 = vld [vmem:[%s9 + $0x38] sm:$0xff]
        %v1667 = vld [vmem:[%s9 + $0x40] sm:$0xff]
        %v1668 = vld [vmem:[%s9 + $0x48] sm:$0xff]
        %v1669 = vld [vmem:[%s9 + $0x50] sm:$0xff]
        %v1670 = vld [vmem:[%s9 + $0x58] sm:$0xff]
        %v1671 = vld [vmem:[%s9 + $0x60] sm:$0xff]
        %v1672 = vld [vmem:[%s9 + $0x68] sm:$0xff]
        %v1673 = vld [vmem:[%s9 + $0x70] sm:$0xff]
        %v1674 = vld [vmem:[%s9 + $0x78] sm:$0xff]
        %v1675 = vld [vmem:[%s10] sm:$0x3]
        %v1677 = vlaneseq
        %v1678 = vshrl.u32 %v1677, 7
        %v1679 = vsub.s32 0, %v1678
        %v1680 = vrot.slane %v1675, %v1679
        %v1681 = vlaneseq
        %v1682 = vshrl.u32 %v1681, 7
        %v1683 = vsub.s32 1, %v1682
        %v1684 = vrot.slane %v1675, %v1683
        %v1703 = vunpack.c.l.b16 %v1659
        %v1704 = vunpack.c.h.b16 %v1659
        %v1705 = vunpack.c.l.b16 %v1660
        %v1706 = vunpack.c.h.b16 %v1660
        %v1707 = vunpack.c.l.b16 %v1661
        %v1708 = vunpack.c.h.b16 %v1661
        %v1709 = vunpack.c.l.b16 %v1662
        %v1710 = vunpack.c.h.b16 %v1662
        %v1711 = vunpack.c.l.b16 %v1663
        %v1712 = vunpack.c.h.b16 %v1663
        %v1713 = vunpack.c.l.b16 %v1664
        %v1714 = vunpack.c.h.b16 %v1664
        %v1715 = vunpack.c.l.b16 %v1665
        %v1716 = vunpack.c.h.b16 %v1665
        %v1717 = vunpack.c.l.b16 %v1666
        %v1718 = vunpack.c.h.b16 %v1666
        %v1719 = vunpack.c.l.b16 %v1667
        %v1720 = vunpack.c.h.b16 %v1667
        %v1721 = vunpack.c.l.b16 %v1668
        %v1722 = vunpack.c.h.b16 %v1668
        %v1723 = vunpack.c.l.b16 %v1669
        %v1724 = vunpack.c.h.b16 %v1669
        %v1725 = vunpack.c.l.b16 %v1670
        %v1726 = vunpack.c.h.b16 %v1670
        %v1727 = vunpack.c.l.b16 %v1671
        %v1728 = vunpack.c.h.b16 %v1671
        %v1729 = vunpack.c.l.b16 %v1672
        %v1730 = vunpack.c.h.b16 %v1672
        %v1731 = vunpack.c.l.b16 %v1673
        %v1732 = vunpack.c.h.b16 %v1673
        %v1733 = vunpack.c.l.b16 %v1674
        %v1734 = vunpack.c.h.b16 %v1674
        %v1735 = vpack.c.b16 %v1705, %v1703
        %v1736 = vpack.c.b16 %v1706, %v1704
        %v1737 = vpack.c.b16 %v1709, %v1707
        %v1738 = vpack.c.b16 %v1710, %v1708
        %v1739 = vpack.c.b16 %v1713, %v1711
        %v1740 = vpack.c.b16 %v1714, %v1712
        %v1741 = vpack.c.b16 %v1717, %v1715
        %v1742 = vpack.c.b16 %v1718, %v1716
        %v1743 = vpack.c.b16 %v1721, %v1719
        %v1744 = vpack.c.b16 %v1722, %v1720
        %v1745 = vpack.c.b16 %v1725, %v1723
        %v1746 = vpack.c.b16 %v1726, %v1724
        %v1747 = vpack.c.b16 %v1729, %v1727
        %v1748 = vpack.c.b16 %v1730, %v1728
        %v1749 = vpack.c.b16 %v1733, %v1731
        %v1750 = vpack.c.b16 %v1734, %v1732
        %1767 = vmatprep.subr.bf16.mxu0 %v1736
        %1768 = vmatpush1.bf16.msra.mxu0 %v1735
        %1769 = vmatprep.subr.bf16.mxu0 %v1738
        %1770 = vmatpush1.bf16.msra.mxu0 %v1737
        %1771 = vmatprep.subr.bf16.mxu0 %v1740
        %1772 = vmatpush1.bf16.msra.mxu0 %v1739
        %1773 = vmatprep.subr.bf16.mxu0 %v1742
        %1774 = vmatpush1.bf16.msra.mxu0 %v1741
        %1775 = vmatprep.subr.bf16.mxu0 %v1744
        %1776 = vmatpush1.bf16.msra.mxu0 %v1743
        %1777 = vmatprep.subr.bf16.mxu0 %v1746
        %1778 = vmatpush1.bf16.msra.mxu0 %v1745
        %1779 = vmatprep.subr.bf16.mxu0 %v1748
        %1780 = vmatpush1.bf16.msra.mxu0 %v1747
        %1781 = vmatprep.subr.bf16.mxu0 %v1750
        %1782 = vmatpush1.bf16.msra.mxu0 %v1749
        %1783 = vmatprep.subr.bf16.mxu0 0
        %1784 = vmatpush1.bf16.msra.mxu0 0
        %1785 = vmatprep.subr.bf16.mxu0 0
        %1786 = vmatpush1.bf16.msra.mxu0 0
        %1787 = vmatprep.subr.bf16.mxu0 0
        %1788 = vmatpush1.bf16.msra.mxu0 0
        %1789 = vmatprep.subr.bf16.mxu0 0
        %1790 = vmatpush1.bf16.msra.mxu0 0
        %1791 = vmatprep.subr.bf16.mxu0 0
        %1792 = vmatpush1.bf16.msra.mxu0 0
        %1793 = vmatprep.subr.bf16.mxu0 0
        %1794 = vmatpush1.bf16.msra.mxu0 0
        %1795 = vmatprep.subr.bf16.mxu0 0
        %1796 = vmatpush1.bf16.msra.mxu0 0
        %1797 = vmatprep.subr.bf16.mxu0 0
        %1798 = vmatpush1.bf16.msra.mxu0 0
        %1799 = vmatprep.mubr.bf16.mxu0 0
        %1800 = vmatmul.mubr.bf16.gmra.mrb[0].mxu0 %v1658
        %v1801 = vpop.f32.mrb[0].mxu0
        %v1802 = vadd.f32 %v1680, %v1801
        %v1803 = vpop.f32.mrb[0].mxu0
        %v1804 = vadd.f32 %v1684, %v1803
        %v1805 = vpop.f32.mrb[0].mxu0
        %v1806 = vadd.f32 %v1680, %v1805
        %v1807 = vpop.f32.mrb[0].mxu0
        %v1808 = vadd.f32 %v1684, %v1807
        %1809 = vdwg.mxu0
        %v1810 = vmul.f32 %v1802, 0.5
        %v1811 = vmul.f32 %v1804, 0.5
        %v1812 = vmul.f32 %v1806, 0.5
        %v1813 = vmul.f32 %v1808, 0.5
        %v1814 = vmul.f32 %v1802, 0.70710677
        %v1815 = vmul.f32 %v1804, 0.70710677
        %v1816 = vmul.f32 %v1806, 0.70710677
        %v1817 = vmul.f32 %v1808, 0.70710677
        %v1818 = verf.f32.pop %v1814
        %v1819 = verf.f32.pop %v1815
        %v1820 = verf.f32.pop %v1816
        %v1821 = verf.f32.pop %v1817
        %v1822 = vadd.f32 %v1818, 1.0
        %v1823 = vadd.f32 %v1819, 1.0
        %v1824 = vadd.f32 %v1820, 1.0
        %v1825 = vadd.f32 %v1821, 1.0
        %v1826 = vmul.f32 %v1810, %v1822
        %v1827 = vmul.f32 %v1811, %v1823
        %v1828 = vmul.f32 %v1812, %v1824
        %v1829 = vmul.f32 %v1813, %v1825
        %v1830 = vpack.c.bf16 %v1828, %v1826
        %v1831 = vpack.c.bf16 %v1829, %v1827
        %v1832 = vld [vmem:[%s11] sm:$0xf]
        %v1833 = vld [vmem:[%s11 + $0x4] sm:$0xf]
        %v1834 = vld [vmem:[%s11 + $0x8] sm:$0xf]
        %v1835 = vld [vmem:[%s11 + $0xc] sm:$0xf]
        %v1836 = vld [vmem:[%s11 + $0x10] sm:$0xf]
        %v1837 = vld [vmem:[%s11 + $0x14] sm:$0xf]
        %v1838 = vld [vmem:[%s11 + $0x18] sm:$0xf]
        %v1839 = vld [vmem:[%s11 + $0x1c] sm:$0xf]
        %v1840 = vld [vmem:[%s11 + $0x20] sm:$0xf]
        %v1841 = vld [vmem:[%s11 + $0x24] sm:$0xf]
        %v1842 = vld [vmem:[%s11 + $0x28] sm:$0xf]
        %v1843 = vld [vmem:[%s11 + $0x2c] sm:$0xf]
        %v1844 = vld [vmem:[%s11 + $0x30] sm:$0xf]
        %v1845 = vld [vmem:[%s11 + $0x34] sm:$0xf]
        %v1846 = vld [vmem:[%s11 + $0x38] sm:$0xf]
        %v1847 = vld [vmem:[%s11 + $0x3c] sm:$0xf]
        %v1848 = vld [vmem:[%s11 + $0x40] sm:$0xf]
        %v1849 = vld [vmem:[%s11 + $0x44] sm:$0xf]
        %v1850 = vld [vmem:[%s11 + $0x48] sm:$0xf]
        %v1851 = vld [vmem:[%s11 + $0x4c] sm:$0xf]
        %v1852 = vld [vmem:[%s11 + $0x50] sm:$0xf]
        %v1853 = vld [vmem:[%s11 + $0x54] sm:$0xf]
        %v1854 = vld [vmem:[%s11 + $0x58] sm:$0xf]
        %v1855 = vld [vmem:[%s11 + $0x5c] sm:$0xf]
        %v1856 = vld [vmem:[%s11 + $0x60] sm:$0xf]
        %v1857 = vld [vmem:[%s11 + $0x64] sm:$0xf]
        %v1858 = vld [vmem:[%s11 + $0x68] sm:$0xf]
        %v1859 = vld [vmem:[%s11 + $0x6c] sm:$0xf]
        %v1860 = vld [vmem:[%s11 + $0x70] sm:$0xf]
        %v1861 = vld [vmem:[%s11 + $0x74] sm:$0xf]
        %v1862 = vld [vmem:[%s11 + $0x78] sm:$0xf]
        %v1863 = vld [vmem:[%s11 + $0x7c] sm:$0xf]
        %v1864 = vld [vmem:[%s12] sm:$0x1]
        %v1866 = vlaneseq
        %v1867 = vshrl.u32 %v1866, 7
        %v1868 = vsub.s32 0, %v1867
        %v1869 = vrot.slane %v1864, %v1868
        %v1903 = vunpack.c.l.b16 %v1832
        %v1904 = vunpack.c.l.b16 %v1833
        %v1905 = vunpack.c.l.b16 %v1834
        %v1906 = vunpack.c.l.b16 %v1835
        %v1907 = vunpack.c.l.b16 %v1836
        %v1908 = vunpack.c.l.b16 %v1837
        %v1909 = vunpack.c.l.b16 %v1838
        %v1910 = vunpack.c.l.b16 %v1839
        %v1911 = vunpack.c.l.b16 %v1840
        %v1912 = vunpack.c.l.b16 %v1841
        %v1913 = vunpack.c.l.b16 %v1842
        %v1914 = vunpack.c.l.b16 %v1843
        %v1915 = vunpack.c.l.b16 %v1844
        %v1916 = vunpack.c.l.b16 %v1845
        %v1917 = vunpack.c.l.b16 %v1846
        %v1918 = vunpack.c.l.b16 %v1847
        %v1919 = vunpack.c.l.b16 %v1848
        %v1920 = vunpack.c.l.b16 %v1849
        %v1921 = vunpack.c.l.b16 %v1850
        %v1922 = vunpack.c.l.b16 %v1851
        %v1923 = vunpack.c.l.b16 %v1852
        %v1924 = vunpack.c.l.b16 %v1853
        %v1925 = vunpack.c.l.b16 %v1854
        %v1926 = vunpack.c.l.b16 %v1855
        %v1927 = vunpack.c.l.b16 %v1856
        %v1928 = vunpack.c.l.b16 %v1857
        %v1929 = vunpack.c.l.b16 %v1858
        %v1930 = vunpack.c.l.b16 %v1859
        %v1931 = vunpack.c.l.b16 %v1860
        %v1932 = vunpack.c.l.b16 %v1861
        %v1933 = vunpack.c.l.b16 %v1862
        %v1934 = vunpack.c.l.b16 %v1863
        %v1935 = vpack.c.b16 %v1904, %v1903
        %v1936 = vpack.c.b16 %v1906, %v1905
        %v1937 = vpack.c.b16 %v1908, %v1907
        %v1938 = vpack.c.b16 %v1910, %v1909
        %v1939 = vpack.c.b16 %v1912, %v1911
        %v1940 = vpack.c.b16 %v1914, %v1913
        %v1941 = vpack.c.b16 %v1916, %v1915
        %v1942 = vpack.c.b16 %v1918, %v1917
        %v1943 = vpack.c.b16 %v1920, %v1919
        %v1944 = vpack.c.b16 %v1922, %v1921
        %v1945 = vpack.c.b16 %v1924, %v1923
        %v1946 = vpack.c.b16 %v1926, %v1925
        %v1947 = vpack.c.b16 %v1928, %v1927
        %v1948 = vpack.c.b16 %v1930, %v1929
        %v1949 = vpack.c.b16 %v1932, %v1931
        %v1950 = vpack.c.b16 %v1934, %v1933
        %1967 = vmatprep.subr.bf16.mxu0 0
        %1968 = vmatpush1.bf16.msra.mxu0 %v1935
        %1969 = vmatprep.subr.bf16.mxu0 0
        %1970 = vmatpush1.bf16.msra.mxu0 %v1936
        %1971 = vmatprep.subr.bf16.mxu0 0
        %1972 = vmatpush1.bf16.msra.mxu0 %v1937
        %1973 = vmatprep.subr.bf16.mxu0 0
        %1974 = vmatpush1.bf16.msra.mxu0 %v1938
        %1975 = vmatprep.subr.bf16.mxu0 0
        %1976 = vmatpush1.bf16.msra.mxu0 %v1939
        %1977 = vmatprep.subr.bf16.mxu0 0
        %1978 = vmatpush1.bf16.msra.mxu0 %v1940
        %1979 = vmatprep.subr.bf16.mxu0 0
        %1980 = vmatpush1.bf16.msra.mxu0 %v1941
        %1981 = vmatprep.subr.bf16.mxu0 0
        %1982 = vmatpush1.bf16.msra.mxu0 %v1942
        %1983 = vmatprep.subr.bf16.mxu0 0
        %1984 = vmatpush1.bf16.msra.mxu0 %v1943
        %1985 = vmatprep.subr.bf16.mxu0 0
        %1986 = vmatpush1.bf16.msra.mxu0 %v1944
        %1987 = vmatprep.subr.bf16.mxu0 0
        %1988 = vmatpush1.bf16.msra.mxu0 %v1945
        %1989 = vmatprep.subr.bf16.mxu0 0
        %1990 = vmatpush1.bf16.msra.mxu0 %v1946
        %1991 = vmatprep.subr.bf16.mxu0 0
        %1992 = vmatpush1.bf16.msra.mxu0 %v1947
        %1993 = vmatprep.subr.bf16.mxu0 0
        %1994 = vmatpush1.bf16.msra.mxu0 %v1948
        %1995 = vmatprep.subr.bf16.mxu0 0
        %1996 = vmatpush1.bf16.msra.mxu0 %v1949
        %1997 = vmatprep.subr.bf16.mxu0 0
        %1998 = vmatpush1.bf16.msra.mxu0 %v1950
        %1999 = vmatprep.mubr.bf16.mxu0 %v1831
        %2000 = vmatmul.mubr.bf16.gmra.mrb[0].mxu0 %v1830
        %v2001 = vpop.f32.mrb[0].mxu0
        %v2002 = vadd.f32 %v1869, %v2001
        %v2003 = vpop.f32.mrb[0].mxu0
        %v2004 = vpop.f32.mrb[0].mxu0
        %v2005 = vadd.f32 %v1869, %v2004
        %v2006 = vpop.f32.mrb[0].mxu0
        %2007 = vdwg.mxu0
        %v2008 = vadd.f32 %v1235, %v2002
        %v2009 = vadd.f32 %v1617, %v2005
        %2010 = vst [vmem:[%s434] sm:$0xff] %v2008
        %2011 = vst [vmem:[%s434 + $0x8] sm:$0xff] %v2009
        %s2012 = sand.u32 %s313, 1
        %s2013 = scalar_lea.sflag [#allocation3], %s2012
        %s2014 = sand.u32 %s313, 1
        %s2015 = smul.addr %s2014, 16
        %s2016 = scalar_lea.vmem [#allocation2], %s2015
        // Predicated region
        $region73: #{tpu_custom_call.1} parent=71 // pred_check
          %p2017 = pneg %p323
        $region74: #{tpu_custom_call.1} parent=71 // pred_check_branch
          %2019 = sbr.rel (%p2017) target = $region76
        $region75: #{tpu_custom_call.1} parent=71 // pred_region
          %s2020 = smul.u32 2, %s27
          %s2022 = ssub.s32 256, 256
          %2023 = vsyncadd %s2013, %s2022
          %s2024 = smul.addr %s2020, 128
          %s2025 = scalar_lea.hbm %s13, %s2024
          %s2026 = sshll.u32 %s2016, 4
          %s2027 = int_to_ptr.vmem [resolvable:$true] %s2026
          %2032 = dma.vmem_to_hbm [thread:$0]  %s2027, 256, %s2025, %s2013, 128, 128, 8
        $region76: #{tpu_custom_call.1} parent=71 // pred_fallthru
          _
      $region72: #{tpu_custom_call.1} parent=5 // pred_fallthru
        _
      %p2033 = scmp.le.s32.totalorder 2, %s22
      // Predicated region
      $region77: #{tpu_custom_call.1} parent=5 // pred_check
        %p2034 = pneg %p2033
      $region78: #{tpu_custom_call.1} parent=5 // pred_check_branch
        %2036 = sbr.rel (%p2034) target = $region80
      $region79: #{tpu_custom_call.1} parent=5 // pred_region
        %s2037 = ssub.s32 %s22, 2
        // Predicated region
        $region81: #{tpu_custom_call.1} parent=79 // pred_check
          %p2038 = pneg %p329
        $region82: #{tpu_custom_call.1} parent=79 // pred_check_branch
          %2040 = sbr.rel (%p2038) target = $region84
        $region83: #{tpu_custom_call.1} parent=79 // pred_region
          %s2041 = sand.u32 %s314, 1
          %s2042 = scalar_lea.sflag [#allocation3], %s2041
          %s2043 = sand.u32 %s314, 1
          %s2044 = smul.addr %s2043, 16
          %s2045 = scalar_lea.vmem [#allocation2], %s2044
          %2046 = dma.done %s2042, 256
        $region84: #{tpu_custom_call.1} parent=79 // pred_fallthru
          _
      $region80: #{tpu_custom_call.1} parent=5 // pred_fallthru
        _
    $region6: #{tpu_custom_call.1} parent=1 // loop_footer
      %s26 = sadd.s32 1, %s22
    $region7: #{tpu_custom_call.1} parent=1 // loop_footer_branch
      %21 = sbr.rel target = $region3
    $region8: #{tpu_custom_call.1} parent=1 // loop_exit
      _
    %2047 = vsyncpa [#allocation3], 1
    %s2048 = scalar_lea.sflag [#allocation3], 1
    %2049 = vsyncpa %s2048, 1

</llo_original>
